<compile_context>
chip_gen: v7x
topology: tpu7x:2x2x1
jax: 0.10.0
libtpu: 0.0.40
codegen_flags: <defaults>
</compile_context>

<pallas_src>
import math

import jax
import jax.numpy as jnp
from jax.experimental import pallas as pl
from jax.experimental.pallas import tpu as pltpu

INPUT_SIZE = 22
HIDDEN = 64
NUM_CLASSES = 4
BN_EPS = 1e-5
OUT_PAD = 128   # lane-dense output width
SUBLANE = 8     # batch padded to a full sublane tile


# ---------------------------------------------------------------------------
# Pallas kernel factory: full LSTM recurrence (2 layers) + FC head in VMEM.
# ---------------------------------------------------------------------------
def make_lstm_fc_kernel(T, NP, H):
    def kernel(x_ref,                 # (T*NP, C)   bf16, time-major, flattened
               w_ih0_ref,             # (C, 4H)     bf16, gate order (i,f,o,g), 0.5 on i/f/o
               w_hh0_ref,             # (H, 4H)     bf16, same scaling
               b0_ref,                # (1, 4H)     f32, b_ih0+b_hh0, 0.5 on i/f/o
               w_ih1_ref,             # (H, 4H)     bf16
               w_hh1_ref,             # (H, 4H)     bf16
               b1_ref,                # (1, 4H)     f32
               fc1_w_ref, fc1_b_ref,  # (H, H) bf16, (1, H) f32
               fc2_w_ref, fc2_b_ref,  # (H, H) bf16, (1, H) f32   (BN1 folded in)
               fc3_w_ref, fc3_b_ref,  # (H, OUT_PAD) bf16, (1, OUT_PAD) f32 (BN2 folded)
               out_ref):              # (NP, OUT_PAD) f32
        # --- hoisted layer-0 input projection: one matmul off the serial chain.
        gx0 = jnp.dot(x_ref[...], w_ih0_ref[...],
                      preferred_element_type=jnp.float32) + b0_ref[...]   # (T*NP, 4H) f32

        w_hh0 = w_hh0_ref[...]
        w_ih1 = w_ih1_ref[...]
        w_hh1 = w_hh1_ref[...]
        b1 = b1_ref[...]

        def activate(gates):
            # gate columns are (i, f, o, g); i/f/o pre-scaled by 0.5 in the
            # weights/bias, so sigmoid(x) = 0.5 * tanh(x/2) + 0.5 becomes one
            # wide tanh over all 4H lanes + a single fused 0.5*t + 0.5.
            t = jnp.tanh(gates)
            sig = 0.5 * t[:, 0:3 * H] + 0.5
            return sig[:, 0:H], sig[:, H:2 * H], sig[:, 2 * H:3 * H], t[:, 3 * H:4 * H]

        h0 = jnp.zeros((NP, H), jnp.float32)
        c0 = jnp.zeros((NP, H), jnp.float32)
        h1 = jnp.zeros((NP, H), jnp.float32)
        c1 = jnp.zeros((NP, H), jnp.float32)

        # Fully unrolled time loop (T static & small): static slices, max ILP.
        for t in range(T):
            # layer-1 hidden-recurrent half depends only on *previous* h1:
            # issue it first so it overlaps with layer-0 of this step.
            gh1 = jnp.dot(h1.astype(jnp.bfloat16), w_hh1,
                          preferred_element_type=jnp.float32)

            # layer 0: only the K=64 recurrent matmul stays on the serial chain
            gates0 = gx0[t * NP:(t + 1) * NP, :] + jnp.dot(
                h0.astype(jnp.bfloat16), w_hh0, preferred_element_type=jnp.float32)
            i0, f0, o0, g0 = activate(gates0)
            c0 = f0 * c0 + i0 * g0
            h0 = o0 * jnp.tanh(c0)

            # layer 1: second K=64 dot plus the early-issued gh1
            gates1 = gh1 + jnp.dot(h0.astype(jnp.bfloat16), w_ih1,
                                   preferred_element_type=jnp.float32) + b1
            i1, f1, o1, g1 = activate(gates1)
            c1 = f1 * c1 + i1 * g1
            h1 = o1 * jnp.tanh(c1)

        # --- FC head (BN folded into fc2/fc3; Dropout is eval-identity).
        # TODO(synk): nn.Dropout is identity in eval mode; stochastic train-mode dropout not modeled.
        y = jnp.maximum(jnp.dot(h1.astype(jnp.bfloat16), fc1_w_ref[...],
                                preferred_element_type=jnp.float32) + fc1_b_ref[...], 0.0)
        y = jnp.maximum(jnp.dot(y.astype(jnp.bfloat16), fc2_w_ref[...],
                                preferred_element_type=jnp.float32) + fc2_b_ref[...], 0.0)
        out_ref[...] = jnp.dot(y.astype(jnp.bfloat16), fc3_w_ref[...],
                               preferred_element_type=jnp.float32) + fc3_b_ref[...]

    return kernel


# ---------------------------------------------------------------------------
# Wrapper: layout plumbing + parameter folding, then one pallas_call.
# ---------------------------------------------------------------------------
def lstm_forward(x_nchw, params):
    N, C, Hdim, W = x_nchw.shape
    assert Hdim == 1, "module's X.view(N, C, W) implies H == 1"
    T = W
    NP = max(SUBLANE, ((N + SUBLANE - 1) // SUBLANE) * SUBLANE)   # sublane-aligned batch

    x = x_nchw.reshape(N, C, W)            # view(N, C, W)
    x = jnp.transpose(x, (0, 2, 1))        # permute(0, 2, 1) -> (N, T, C)
    x = jnp.transpose(x, (1, 0, 2))        # -> (T, N, C) time-major
    x = jnp.pad(x.astype(jnp.float32), ((0, 0), (0, NP - N), (0, 0)))  # pad batch to NP
    x = x.reshape(T * NP, C)

    (w_ih0, w_hh0, b_ih0, b_hh0,
     w_ih1, w_hh1, b_ih1, b_hh1,
     fc1_w, fc1_b, bn1_g, bn1_b, bn1_rm, bn1_rv,
     fc2_w, fc2_b, bn2_g, bn2_b, bn2_rm, bn2_rv,
     fc3_w, fc3_b) = params

    H = w_hh0.shape[1]

    # PyTorch gate row order is (i, f, g, o); reorder to (i, f, o, g) and fold
    # the 0.5 of the sigmoid-as-tanh identity into the i/f/o rows.
    def prep_gates(w):
        i, f, g, o = jnp.split(w, 4, axis=0)
        return jnp.concatenate([0.5 * i, 0.5 * f, 0.5 * o, g], axis=0)

    w_ih0_k = prep_gates(w_ih0).T                       # (C, 4H)
    w_hh0_k = prep_gates(w_hh0).T                       # (H, 4H)
    b0_k = prep_gates((b_ih0 + b_hh0)[:, None]).T       # (1, 4H)

    w_ih1_k = prep_gates(w_ih1).T                       # (H, 4H)
    w_hh1_k = prep_gates(w_hh1).T                       # (H, 4H)
    b1_k = prep_gates((b_ih1 + b_hh1)[:, None]).T       # (1, 4H)

    # Eval-mode BN: fold scale/offset into the *next* Linear (BN sits after ReLU).
    bn1_scale = bn1_g / jnp.sqrt(bn1_rv + BN_EPS)
    bn1_off = bn1_b - bn1_rm * bn1_scale
    bn2_scale = bn2_g / jnp.sqrt(bn2_rv + BN_EPS)
    bn2_off = bn2_b - bn2_rm * bn2_scale

    fc1_wT = fc1_w.T                                    # (H, H)
    fc1_bk = fc1_b[None, :]
    fc2_wT = bn1_scale[:, None] * fc2_w.T               # fold BN1 scale
    fc2_bk = (fc2_b + bn1_off @ fc2_w.T)[None, :]       # fold BN1 offset
    fc3_wT = bn2_scale[:, None] * fc3_w.T               # (H, num_classes), BN2 folded
    fc3_bk = fc3_b + bn2_off @ fc3_w.T                  # (num_classes,)

    num_classes = fc3_w.shape[0]
    fc3_wT_pad = jnp.pad(fc3_wT, ((0, 0), (0, OUT_PAD - num_classes)))
    fc3_bk_pad = jnp.pad(fc3_bk, (0, OUT_PAD - num_classes))[None, :]

    # MXU operands in bf16 (cast once), biases stay f32 for f32 accumulation/adds.
    bf = jnp.bfloat16
    f32 = jnp.float32
    args = (x.astype(bf),
            w_ih0_k.astype(bf), w_hh0_k.astype(bf), b0_k.astype(f32),
            w_ih1_k.astype(bf), w_hh1_k.astype(bf), b1_k.astype(f32),
            fc1_wT.astype(bf), fc1_bk.astype(f32),
            fc2_wT.astype(bf), fc2_bk.astype(f32),
            fc3_wT_pad.astype(bf), fc3_bk_pad.astype(f32))

    kernel = make_lstm_fc_kernel(T, NP, H)
    in_specs = [pl.BlockSpec(memory_space=pltpu.MemorySpace.VMEM) for _ in args]
    out = pl.pallas_call(
        kernel,
        out_shape=jax.ShapeDtypeStruct((NP, OUT_PAD), jnp.float32),
        in_specs=in_specs,
        out_specs=pl.BlockSpec(memory_space=pltpu.MemorySpace.VMEM),
    )(*args)
    return out[:N, :num_classes]


# ---------------------------------------------------------------------------
# Deterministic parameter init (PyTorch-style uniform bounds).
# ---------------------------------------------------------------------------
def init_params(key):
    ks = jax.random.split(key, 24)

    def unif(k, shape, bound):
        return jax.random.uniform(k, shape, jnp.float32, -bound, bound)

    bH = 1.0 / math.sqrt(HIDDEN)

    # LSTM layer 0
    w_ih0 = unif(ks[0], (4 * HIDDEN, INPUT_SIZE), bH)
    w_hh0 = unif(ks[1], (4 * HIDDEN, HIDDEN), bH)
    b_ih0 = unif(ks[2], (4 * HIDDEN,), bH)
    b_hh0 = unif(ks[3], (4 * HIDDEN,), bH)
    # LSTM layer 1
    w_ih1 = unif(ks[4], (4 * HIDDEN, HIDDEN), bH)
    w_hh1 = unif(ks[5], (4 * HIDDEN, HIDDEN), bH)
    b_ih1 = unif(ks[6], (4 * HIDDEN,), bH)
    b_hh1 = unif(ks[7], (4 * HIDDEN,), bH)
    # FC head
    fc1_w = unif(ks[8], (HIDDEN, HIDDEN), bH)
    fc1_b = unif(ks[9], (HIDDEN,), bH)
    bn1_g = 1.0 + 0.1 * unif(ks[10], (HIDDEN,), 1.0)
    bn1_b = 0.1 * unif(ks[11], (HIDDEN,), 1.0)
    bn1_rm = 0.1 * unif(ks[18], (HIDDEN,), 1.0)
    bn1_rv = 1.0 + 0.1 * unif(ks[19], (HIDDEN,), 1.0)
    fc2_w = unif(ks[12], (HIDDEN, HIDDEN), bH)
    fc2_b = unif(ks[13], (HIDDEN,), bH)
    bn2_g = 1.0 + 0.1 * unif(ks[14], (HIDDEN,), 1.0)
    bn2_b = 0.1 * unif(ks[15], (HIDDEN,), 1.0)
    bn2_rm = 0.1 * unif(ks[20], (HIDDEN,), 1.0)
    bn2_rv = 1.0 + 0.1 * unif(ks[21], (HIDDEN,), 1.0)
    fc3_w = unif(ks[16], (NUM_CLASSES, HIDDEN), bH)
    fc3_b = unif(ks[17], (NUM_CLASSES,), bH)

    return (w_ih0, w_hh0, b_ih0, b_hh0,
            w_ih1, w_hh1, b_ih1, b_hh1,
            fc1_w, fc1_b, bn1_g, bn1_b, bn1_rm, bn1_rv,
            fc2_w, fc2_b, bn2_g, bn2_b, bn2_rm, bn2_rv,
            fc3_w, fc3_b)


# ---------------------------------------------------------------------------
# Pure-JAX f32 reference (PyTorch math, no folding/reordering) for sanity check.
# ---------------------------------------------------------------------------
def reference_forward(x_nchw, params):
    (w_ih0, w_hh0, b_ih0, b_hh0,
     w_ih1, w_hh1, b_ih1, b_hh1,
     fc1_w, fc1_b, bn1_g, bn1_b, bn1_rm, bn1_rv,
     fc2_w, fc2_b, bn2_g, bn2_b, bn2_rm, bn2_rv,
     fc3_w, fc3_b) = params
    N, C, _, W = x_nchw.shape
    x = jnp.transpose(x_nchw.reshape(N, C, W), (0, 2, 1)).astype(jnp.float32)  # (N, T, C)

    def cell(x_t, h, c, w_ih, w_hh, b_ih, b_hh):
        g = x_t @ w_ih.T + h @ w_hh.T + b_ih + b_hh
        i, f, gg, o = jnp.split(g, 4, axis=-1)
        c = jax.nn.sigmoid(f) * c + jax.nn.sigmoid(i) * jnp.tanh(gg)
        h = jax.nn.sigmoid(o) * jnp.tanh(c)
        return h, c

    h0 = c0 = h1 = c1 = jnp.zeros((N, HIDDEN), jnp.float32)
    for t in range(W):
        h0, c0 = cell(x[:, t, :], h0, c0, w_ih0, w_hh0, b_ih0, b_hh0)
        h1, c1 = cell(h0, h1, c1, w_ih1, w_hh1, b_ih1, b_hh1)

    def bn(y, g, b, rm, rv):
        return (y - rm) / jnp.sqrt(rv + BN_EPS) * g + b

    y = jnp.maximum(h1 @ fc1_w.T + fc1_b, 0.0)
    y = bn(y, bn1_g, bn1_b, bn1_rm, bn1_rv)
    y = jnp.maximum(y @ fc2_w.T + fc2_b, 0.0)
    y = bn(y, bn2_g, bn2_b, bn2_rm, bn2_rv)
    return y @ fc3_w.T + fc3_b


if __name__ == "__main__":
    key = jax.random.PRNGKey(0)
    k_x, k_p = jax.random.split(key)

    # Shapes implied by the forward: N=2 batch, C=22 features (=input_size),
    # H=1 (required by the view), W=8 time steps.
    x = jax.random.normal(k_x, (2, INPUT_SIZE, 1, 8), dtype=jnp.float32)
    params = init_params(k_p)

    out = lstm_forward(x, params)
    out = jax.block_until_ready(out)

    ref = reference_forward(x, params)
    assert out.shape == (2, NUM_CLASSES)
    # bf16 MXU operands (f32 accumulation) perturb logits at the ~1e-2 level
    # vs the bit-exact f32 reference; tolerance loosened accordingly.
    assert jnp.allclose(out, ref, atol=5e-2, rtol=5e-2), (out, ref)

    print("KERNEL_OK")
</pallas_src>

<mosaic_0001>
module attributes {stable_mosaic.version = 11 : i64} {
  func.func @kernel(%arg0: memref<64x22xbf16, #tpu.memory_space<vmem>>, %arg1: memref<22x256xbf16, #tpu.memory_space<vmem>>, %arg2: memref<64x256xbf16, #tpu.memory_space<vmem>>, %arg3: memref<1x256xf32, #tpu.memory_space<vmem>>, %arg4: memref<64x256xbf16, #tpu.memory_space<vmem>>, %arg5: memref<64x256xbf16, #tpu.memory_space<vmem>>, %arg6: memref<1x256xf32, #tpu.memory_space<vmem>>, %arg7: memref<64x64xbf16, #tpu.memory_space<vmem>>, %arg8: memref<1x64xf32, #tpu.memory_space<vmem>>, %arg9: memref<64x64xbf16, #tpu.memory_space<vmem>>, %arg10: memref<1x64xf32, #tpu.memory_space<vmem>>, %arg11: memref<64x128xbf16, #tpu.memory_space<vmem>>, %arg12: memref<1x128xf32, #tpu.memory_space<vmem>>, %arg13: memref<8x128xf32, #tpu.memory_space<vmem>>) attributes {dimension_semantics = [], scalar_prefetch = 0 : i64, scratch_operands = 0 : i64, tpu.core_type = #tpu.core_type<tc>} {
    %c0 = arith.constant 0 : index
    %c0_0 = arith.constant 0 : index
    %0 = vector.load %arg0[%c0, %c0_0] : memref<64x22xbf16, #tpu.memory_space<vmem>>, vector<64x22xbf16>
    %c0_1 = arith.constant 0 : index
    %c0_2 = arith.constant 0 : index
    %1 = vector.load %arg1[%c0_1, %c0_2] : memref<22x256xbf16, #tpu.memory_space<vmem>>, vector<22x256xbf16>
    %cst = arith.constant dense<0.000000e+00> : vector<64x256xf32>
    %2 = tpu.matmul %0, %1, %cst {dimension_numbers = #tpu.dot_dimension_numbers<[1], [0], [0], [1], [0, 0, 1, 1], [], []>} : vector<64x22xbf16>, vector<22x256xbf16>, vector<64x256xf32> -> vector<64x256xf32>
    %c0_3 = arith.constant 0 : index
    %c0_4 = arith.constant 0 : index
    %3 = vector.load %arg3[%c0_3, %c0_4] : memref<1x256xf32, #tpu.memory_space<vmem>>, vector<1x256xf32>
    %4 = vector.broadcast %3 : vector<1x256xf32> to vector<64x256xf32>
    %5 = arith.addf %2, %4 : vector<64x256xf32>
    %c0_5 = arith.constant 0 : index
    %c0_6 = arith.constant 0 : index
    %6 = vector.load %arg2[%c0_5, %c0_6] : memref<64x256xbf16, #tpu.memory_space<vmem>>, vector<64x256xbf16>
    %c0_7 = arith.constant 0 : index
    %c0_8 = arith.constant 0 : index
    %7 = vector.load %arg4[%c0_7, %c0_8] : memref<64x256xbf16, #tpu.memory_space<vmem>>, vector<64x256xbf16>
    %c0_9 = arith.constant 0 : index
    %c0_10 = arith.constant 0 : index
    %8 = vector.load %arg5[%c0_9, %c0_10] : memref<64x256xbf16, #tpu.memory_space<vmem>>, vector<64x256xbf16>
    %c0_11 = arith.constant 0 : index
    %c0_12 = arith.constant 0 : index
    %9 = vector.load %arg6[%c0_11, %c0_12] : memref<1x256xf32, #tpu.memory_space<vmem>>, vector<1x256xf32>
    %cst_13 = arith.constant 0.000000e+00 : f32
    %10 = vector.broadcast %cst_13 : f32 to vector<8x64xf32>
    %cst_14 = arith.constant 0.000000e+00 : f32
    %11 = vector.broadcast %cst_14 : f32 to vector<8x64xf32>
    %cst_15 = arith.constant 0.000000e+00 : f32
    %12 = vector.broadcast %cst_15 : f32 to vector<8x64xf32>
    %cst_16 = arith.constant 0.000000e+00 : f32
    %13 = vector.broadcast %cst_16 : f32 to vector<8x64xf32>
    %14 = arith.truncf %12 : vector<8x64xf32> to vector<8x64xbf16>
    %cst_17 = arith.constant dense<0.000000e+00> : vector<8x256xf32>
    %15 = tpu.matmul %14, %8, %cst_17 {dimension_numbers = #tpu.dot_dimension_numbers<[1], [0], [0], [1], [0, 0, 1, 1], [], []>} : vector<8x64xbf16>, vector<64x256xbf16>, vector<8x256xf32> -> vector<8x256xf32>
    %16 = vector.extract_strided_slice %5 {offsets = [0, 0], sizes = [8, 256], strides = [1, 1]} : vector<64x256xf32> to vector<8x256xf32>
    %17 = arith.truncf %10 : vector<8x64xf32> to vector<8x64xbf16>
    %cst_18 = arith.constant dense<0.000000e+00> : vector<8x256xf32>
    %18 = tpu.matmul %17, %6, %cst_18 {dimension_numbers = #tpu.dot_dimension_numbers<[1], [0], [0], [1], [0, 0, 1, 1], [], []>} : vector<8x64xbf16>, vector<64x256xbf16>, vector<8x256xf32> -> vector<8x256xf32>
    %19 = arith.addf %16, %18 : vector<8x256xf32>
    %20 = math.tanh %19 : vector<8x256xf32>
    %21 = vector.extract_strided_slice %20 {offsets = [0, 0], sizes = [8, 192], strides = [1, 1]} : vector<8x256xf32> to vector<8x192xf32>
    %cst_19 = arith.constant 5.000000e-01 : f32
    %22 = vector.broadcast %cst_19 : f32 to vector<8x192xf32>
    %23 = arith.mulf %22, %21 : vector<8x192xf32>
    %cst_20 = arith.constant 5.000000e-01 : f32
    %24 = vector.broadcast %cst_20 : f32 to vector<8x192xf32>
    %25 = arith.addf %23, %24 : vector<8x192xf32>
    %26 = vector.extract_strided_slice %25 {offsets = [0, 0], sizes = [8, 64], strides = [1, 1]} : vector<8x192xf32> to vector<8x64xf32>
    %27 = vector.extract_strided_slice %25 {offsets = [0, 64], sizes = [8, 64], strides = [1, 1]} : vector<8x192xf32> to vector<8x64xf32>
    %28 = vector.extract_strided_slice %25 {offsets = [0, 128], sizes = [8, 64], strides = [1, 1]} : vector<8x192xf32> to vector<8x64xf32>
    %29 = vector.extract_strided_slice %20 {offsets = [0, 192], sizes = [8, 64], strides = [1, 1]} : vector<8x256xf32> to vector<8x64xf32>
    %30 = arith.mulf %27, %11 : vector<8x64xf32>
    %31 = arith.mulf %26, %29 : vector<8x64xf32>
    %32 = arith.addf %30, %31 : vector<8x64xf32>
    %33 = math.tanh %32 : vector<8x64xf32>
    %34 = arith.mulf %28, %33 : vector<8x64xf32>
    %35 = arith.truncf %34 : vector<8x64xf32> to vector<8x64xbf16>
    %cst_21 = arith.constant dense<0.000000e+00> : vector<8x256xf32>
    %36 = tpu.matmul %35, %7, %cst_21 {dimension_numbers = #tpu.dot_dimension_numbers<[1], [0], [0], [1], [0, 0, 1, 1], [], []>} : vector<8x64xbf16>, vector<64x256xbf16>, vector<8x256xf32> -> vector<8x256xf32>
    %37 = arith.addf %15, %36 : vector<8x256xf32>
    %38 = vector.broadcast %9 : vector<1x256xf32> to vector<8x256xf32>
    %39 = arith.addf %37, %38 : vector<8x256xf32>
    %40 = math.tanh %39 : vector<8x256xf32>
    %41 = vector.extract_strided_slice %40 {offsets = [0, 0], sizes = [8, 192], strides = [1, 1]} : vector<8x256xf32> to vector<8x192xf32>
    %cst_22 = arith.constant 5.000000e-01 : f32
    %42 = vector.broadcast %cst_22 : f32 to vector<8x192xf32>
    %43 = arith.mulf %42, %41 : vector<8x192xf32>
    %cst_23 = arith.constant 5.000000e-01 : f32
    %44 = vector.broadcast %cst_23 : f32 to vector<8x192xf32>
    %45 = arith.addf %43, %44 : vector<8x192xf32>
    %46 = vector.extract_strided_slice %45 {offsets = [0, 0], sizes = [8, 64], strides = [1, 1]} : vector<8x192xf32> to vector<8x64xf32>
    %47 = vector.extract_strided_slice %45 {offsets = [0, 64], sizes = [8, 64], strides = [1, 1]} : vector<8x192xf32> to vector<8x64xf32>
    %48 = vector.extract_strided_slice %45 {offsets = [0, 128], sizes = [8, 64], strides = [1, 1]} : vector<8x192xf32> to vector<8x64xf32>
    %49 = vector.extract_strided_slice %40 {offsets = [0, 192], sizes = [8, 64], strides = [1, 1]} : vector<8x256xf32> to vector<8x64xf32>
    %50 = arith.mulf %47, %13 : vector<8x64xf32>
    %51 = arith.mulf %46, %49 : vector<8x64xf32>
    %52 = arith.addf %50, %51 : vector<8x64xf32>
    %53 = math.tanh %52 : vector<8x64xf32>
    %54 = arith.mulf %48, %53 : vector<8x64xf32>
    %55 = arith.truncf %54 : vector<8x64xf32> to vector<8x64xbf16>
    %cst_24 = arith.constant dense<0.000000e+00> : vector<8x256xf32>
    %56 = tpu.matmul %55, %8, %cst_24 {dimension_numbers = #tpu.dot_dimension_numbers<[1], [0], [0], [1], [0, 0, 1, 1], [], []>} : vector<8x64xbf16>, vector<64x256xbf16>, vector<8x256xf32> -> vector<8x256xf32>
    %57 = vector.extract_strided_slice %5 {offsets = [8, 0], sizes = [8, 256], strides = [1, 1]} : vector<64x256xf32> to vector<8x256xf32>
    %58 = arith.truncf %34 : vector<8x64xf32> to vector<8x64xbf16>
    %cst_25 = arith.constant dense<0.000000e+00> : vector<8x256xf32>
    %59 = tpu.matmul %58, %6, %cst_25 {dimension_numbers = #tpu.dot_dimension_numbers<[1], [0], [0], [1], [0, 0, 1, 1], [], []>} : vector<8x64xbf16>, vector<64x256xbf16>, vector<8x256xf32> -> vector<8x256xf32>
    %60 = arith.addf %57, %59 : vector<8x256xf32>
    %61 = math.tanh %60 : vector<8x256xf32>
    %62 = vector.extract_strided_slice %61 {offsets = [0, 0], sizes = [8, 192], strides = [1, 1]} : vector<8x256xf32> to vector<8x192xf32>
    %cst_26 = arith.constant 5.000000e-01 : f32
    %63 = vector.broadcast %cst_26 : f32 to vector<8x192xf32>
    %64 = arith.mulf %63, %62 : vector<8x192xf32>
    %cst_27 = arith.constant 5.000000e-01 : f32
    %65 = vector.broadcast %cst_27 : f32 to vector<8x192xf32>
    %66 = arith.addf %64, %65 : vector<8x192xf32>
    %67 = vector.extract_strided_slice %66 {offsets = [0, 0], sizes = [8, 64], strides = [1, 1]} : vector<8x192xf32> to vector<8x64xf32>
    %68 = vector.extract_strided_slice %66 {offsets = [0, 64], sizes = [8, 64], strides = [1, 1]} : vector<8x192xf32> to vector<8x64xf32>
    %69 = vector.extract_strided_slice %66 {offsets = [0, 128], sizes = [8, 64], strides = [1, 1]} : vector<8x192xf32> to vector<8x64xf32>
    %70 = vector.extract_strided_slice %61 {offsets = [0, 192], sizes = [8, 64], strides = [1, 1]} : vector<8x256xf32> to vector<8x64xf32>
    %71 = arith.mulf %68, %32 : vector<8x64xf32>
    %72 = arith.mulf %67, %70 : vector<8x64xf32>
    %73 = arith.addf %71, %72 : vector<8x64xf32>
    %74 = math.tanh %73 : vector<8x64xf32>
    %75 = arith.mulf %69, %74 : vector<8x64xf32>
    %76 = arith.truncf %75 : vector<8x64xf32> to vector<8x64xbf16>
    %cst_28 = arith.constant dense<0.000000e+00> : vector<8x256xf32>
    %77 = tpu.matmul %76, %7, %cst_28 {dimension_numbers = #tpu.dot_dimension_numbers<[1], [0], [0], [1], [0, 0, 1, 1], [], []>} : vector<8x64xbf16>, vector<64x256xbf16>, vector<8x256xf32> -> vector<8x256xf32>
    %78 = arith.addf %56, %77 : vector<8x256xf32>
    %79 = vector.broadcast %9 : vector<1x256xf32> to vector<8x256xf32>
    %80 = arith.addf %78, %79 : vector<8x256xf32>
    %81 = math.tanh %80 : vector<8x256xf32>
    %82 = vector.extract_strided_slice %81 {offsets = [0, 0], sizes = [8, 192], strides = [1, 1]} : vector<8x256xf32> to vector<8x192xf32>
    %cst_29 = arith.constant 5.000000e-01 : f32
    %83 = vector.broadcast %cst_29 : f32 to vector<8x192xf32>
    %84 = arith.mulf %83, %82 : vector<8x192xf32>
    %cst_30 = arith.constant 5.000000e-01 : f32
    %85 = vector.broadcast %cst_30 : f32 to vector<8x192xf32>
    %86 = arith.addf %84, %85 : vector<8x192xf32>
    %87 = vector.extract_strided_slice %86 {offsets = [0, 0], sizes = [8, 64], strides = [1, 1]} : vector<8x192xf32> to vector<8x64xf32>
    %88 = vector.extract_strided_slice %86 {offsets = [0, 64], sizes = [8, 64], strides = [1, 1]} : vector<8x192xf32> to vector<8x64xf32>
    %89 = vector.extract_strided_slice %86 {offsets = [0, 128], sizes = [8, 64], strides = [1, 1]} : vector<8x192xf32> to vector<8x64xf32>
    %90 = vector.extract_strided_slice %81 {offsets = [0, 192], sizes = [8, 64], strides = [1, 1]} : vector<8x256xf32> to vector<8x64xf32>
    %91 = arith.mulf %88, %52 : vector<8x64xf32>
    %92 = arith.mulf %87, %90 : vector<8x64xf32>
    %93 = arith.addf %91, %92 : vector<8x64xf32>
    %94 = math.tanh %93 : vector<8x64xf32>
    %95 = arith.mulf %89, %94 : vector<8x64xf32>
    %96 = arith.truncf %95 : vector<8x64xf32> to vector<8x64xbf16>
    %cst_31 = arith.constant dense<0.000000e+00> : vector<8x256xf32>
    %97 = tpu.matmul %96, %8, %cst_31 {dimension_numbers = #tpu.dot_dimension_numbers<[1], [0], [0], [1], [0, 0, 1, 1], [], []>} : vector<8x64xbf16>, vector<64x256xbf16>, vector<8x256xf32> -> vector<8x256xf32>
    %98 = vector.extract_strided_slice %5 {offsets = [16, 0], sizes = [8, 256], strides = [1, 1]} : vector<64x256xf32> to vector<8x256xf32>
    %99 = arith.truncf %75 : vector<8x64xf32> to vector<8x64xbf16>
    %cst_32 = arith.constant dense<0.000000e+00> : vector<8x256xf32>
    %100 = tpu.matmul %99, %6, %cst_32 {dimension_numbers = #tpu.dot_dimension_numbers<[1], [0], [0], [1], [0, 0, 1, 1], [], []>} : vector<8x64xbf16>, vector<64x256xbf16>, vector<8x256xf32> -> vector<8x256xf32>
    %101 = arith.addf %98, %100 : vector<8x256xf32>
    %102 = math.tanh %101 : vector<8x256xf32>
    %103 = vector.extract_strided_slice %102 {offsets = [0, 0], sizes = [8, 192], strides = [1, 1]} : vector<8x256xf32> to vector<8x192xf32>
    %cst_33 = arith.constant 5.000000e-01 : f32
    %104 = vector.broadcast %cst_33 : f32 to vector<8x192xf32>
    %105 = arith.mulf %104, %103 : vector<8x192xf32>
    %cst_34 = arith.constant 5.000000e-01 : f32
    %106 = vector.broadcast %cst_34 : f32 to vector<8x192xf32>
    %107 = arith.addf %105, %106 : vector<8x192xf32>
    %108 = vector.extract_strided_slice %107 {offsets = [0, 0], sizes = [8, 64], strides = [1, 1]} : vector<8x192xf32> to vector<8x64xf32>
    %109 = vector.extract_strided_slice %107 {offsets = [0, 64], sizes = [8, 64], strides = [1, 1]} : vector<8x192xf32> to vector<8x64xf32>
    %110 = vector.extract_strided_slice %107 {offsets = [0, 128], sizes = [8, 64], strides = [1, 1]} : vector<8x192xf32> to vector<8x64xf32>
    %111 = vector.extract_strided_slice %102 {offsets = [0, 192], sizes = [8, 64], strides = [1, 1]} : vector<8x256xf32> to vector<8x64xf32>
    %112 = arith.mulf %109, %73 : vector<8x64xf32>
    %113 = arith.mulf %108, %111 : vector<8x64xf32>
    %114 = arith.addf %112, %113 : vector<8x64xf32>
    %115 = math.tanh %114 : vector<8x64xf32>
    %116 = arith.mulf %110, %115 : vector<8x64xf32>
    %117 = arith.truncf %116 : vector<8x64xf32> to vector<8x64xbf16>
    %cst_35 = arith.constant dense<0.000000e+00> : vector<8x256xf32>
    %118 = tpu.matmul %117, %7, %cst_35 {dimension_numbers = #tpu.dot_dimension_numbers<[1], [0], [0], [1], [0, 0, 1, 1], [], []>} : vector<8x64xbf16>, vector<64x256xbf16>, vector<8x256xf32> -> vector<8x256xf32>
    %119 = arith.addf %97, %118 : vector<8x256xf32>
    %120 = vector.broadcast %9 : vector<1x256xf32> to vector<8x256xf32>
    %121 = arith.addf %119, %120 : vector<8x256xf32>
    %122 = math.tanh %121 : vector<8x256xf32>
    %123 = vector.extract_strided_slice %122 {offsets = [0, 0], sizes = [8, 192], strides = [1, 1]} : vector<8x256xf32> to vector<8x192xf32>
    %cst_36 = arith.constant 5.000000e-01 : f32
    %124 = vector.broadcast %cst_36 : f32 to vector<8x192xf32>
    %125 = arith.mulf %124, %123 : vector<8x192xf32>
    %cst_37 = arith.constant 5.000000e-01 : f32
    %126 = vector.broadcast %cst_37 : f32 to vector<8x192xf32>
    %127 = arith.addf %125, %126 : vector<8x192xf32>
    %128 = vector.extract_strided_slice %127 {offsets = [0, 0], sizes = [8, 64], strides = [1, 1]} : vector<8x192xf32> to vector<8x64xf32>
    %129 = vector.extract_strided_slice %127 {offsets = [0, 64], sizes = [8, 64], strides = [1, 1]} : vector<8x192xf32> to vector<8x64xf32>
    %130 = vector.extract_strided_slice %127 {offsets = [0, 128], sizes = [8, 64], strides = [1, 1]} : vector<8x192xf32> to vector<8x64xf32>
    %131 = vector.extract_strided_slice %122 {offsets = [0, 192], sizes = [8, 64], strides = [1, 1]} : vector<8x256xf32> to vector<8x64xf32>
    %132 = arith.mulf %129, %93 : vector<8x64xf32>
    %133 = arith.mulf %128, %131 : vector<8x64xf32>
    %134 = arith.addf %132, %133 : vector<8x64xf32>
    %135 = math.tanh %134 : vector<8x64xf32>
    %136 = arith.mulf %130, %135 : vector<8x64xf32>
    %137 = arith.truncf %136 : vector<8x64xf32> to vector<8x64xbf16>
    %cst_38 = arith.constant dense<0.000000e+00> : vector<8x256xf32>
    %138 = tpu.matmul %137, %8, %cst_38 {dimension_numbers = #tpu.dot_dimension_numbers<[1], [0], [0], [1], [0, 0, 1, 1], [], []>} : vector<8x64xbf16>, vector<64x256xbf16>, vector<8x256xf32> -> vector<8x256xf32>
    %139 = vector.extract_strided_slice %5 {offsets = [24, 0], sizes = [8, 256], strides = [1, 1]} : vector<64x256xf32> to vector<8x256xf32>
    %140 = arith.truncf %116 : vector<8x64xf32> to vector<8x64xbf16>
    %cst_39 = arith.constant dense<0.000000e+00> : vector<8x256xf32>
    %141 = tpu.matmul %140, %6, %cst_39 {dimension_numbers = #tpu.dot_dimension_numbers<[1], [0], [0], [1], [0, 0, 1, 1], [], []>} : vector<8x64xbf16>, vector<64x256xbf16>, vector<8x256xf32> -> vector<8x256xf32>
    %142 = arith.addf %139, %141 : vector<8x256xf32>
    %143 = math.tanh %142 : vector<8x256xf32>
    %144 = vector.extract_strided_slice %143 {offsets = [0, 0], sizes = [8, 192], strides = [1, 1]} : vector<8x256xf32> to vector<8x192xf32>
    %cst_40 = arith.constant 5.000000e-01 : f32
    %145 = vector.broadcast %cst_40 : f32 to vector<8x192xf32>
    %146 = arith.mulf %145, %144 : vector<8x192xf32>
    %cst_41 = arith.constant 5.000000e-01 : f32
    %147 = vector.broadcast %cst_41 : f32 to vector<8x192xf32>
    %148 = arith.addf %146, %147 : vector<8x192xf32>
    %149 = vector.extract_strided_slice %148 {offsets = [0, 0], sizes = [8, 64], strides = [1, 1]} : vector<8x192xf32> to vector<8x64xf32>
    %150 = vector.extract_strided_slice %148 {offsets = [0, 64], sizes = [8, 64], strides = [1, 1]} : vector<8x192xf32> to vector<8x64xf32>
    %151 = vector.extract_strided_slice %148 {offsets = [0, 128], sizes = [8, 64], strides = [1, 1]} : vector<8x192xf32> to vector<8x64xf32>
    %152 = vector.extract_strided_slice %143 {offsets = [0, 192], sizes = [8, 64], strides = [1, 1]} : vector<8x256xf32> to vector<8x64xf32>
    %153 = arith.mulf %150, %114 : vector<8x64xf32>
    %154 = arith.mulf %149, %152 : vector<8x64xf32>
    %155 = arith.addf %153, %154 : vector<8x64xf32>
    %156 = math.tanh %155 : vector<8x64xf32>
    %157 = arith.mulf %151, %156 : vector<8x64xf32>
    %158 = arith.truncf %157 : vector<8x64xf32> to vector<8x64xbf16>
    %cst_42 = arith.constant dense<0.000000e+00> : vector<8x256xf32>
    %159 = tpu.matmul %158, %7, %cst_42 {dimension_numbers = #tpu.dot_dimension_numbers<[1], [0], [0], [1], [0, 0, 1, 1], [], []>} : vector<8x64xbf16>, vector<64x256xbf16>, vector<8x256xf32> -> vector<8x256xf32>
    %160 = arith.addf %138, %159 : vector<8x256xf32>
    %161 = vector.broadcast %9 : vector<1x256xf32> to vector<8x256xf32>
    %162 = arith.addf %160, %161 : vector<8x256xf32>
    %163 = math.tanh %162 : vector<8x256xf32>
    %164 = vector.extract_strided_slice %163 {offsets = [0, 0], sizes = [8, 192], strides = [1, 1]} : vector<8x256xf32> to vector<8x192xf32>
    %cst_43 = arith.constant 5.000000e-01 : f32
    %165 = vector.broadcast %cst_43 : f32 to vector<8x192xf32>
    %166 = arith.mulf %165, %164 : vector<8x192xf32>
    %cst_44 = arith.constant 5.000000e-01 : f32
    %167 = vector.broadcast %cst_44 : f32 to vector<8x192xf32>
    %168 = arith.addf %166, %167 : vector<8x192xf32>
    %169 = vector.extract_strided_slice %168 {offsets = [0, 0], sizes = [8, 64], strides = [1, 1]} : vector<8x192xf32> to vector<8x64xf32>
    %170 = vector.extract_strided_slice %168 {offsets = [0, 64], sizes = [8, 64], strides = [1, 1]} : vector<8x192xf32> to vector<8x64xf32>
    %171 = vector.extract_strided_slice %168 {offsets = [0, 128], sizes = [8, 64], strides = [1, 1]} : vector<8x192xf32> to vector<8x64xf32>
    %172 = vector.extract_strided_slice %163 {offsets = [0, 192], sizes = [8, 64], strides = [1, 1]} : vector<8x256xf32> to vector<8x64xf32>
    %173 = arith.mulf %170, %134 : vector<8x64xf32>
    %174 = arith.mulf %169, %172 : vector<8x64xf32>
    %175 = arith.addf %173, %174 : vector<8x64xf32>
    %176 = math.tanh %175 : vector<8x64xf32>
    %177 = arith.mulf %171, %176 : vector<8x64xf32>
    %178 = arith.truncf %177 : vector<8x64xf32> to vector<8x64xbf16>
    %cst_45 = arith.constant dense<0.000000e+00> : vector<8x256xf32>
    %179 = tpu.matmul %178, %8, %cst_45 {dimension_numbers = #tpu.dot_dimension_numbers<[1], [0], [0], [1], [0, 0, 1, 1], [], []>} : vector<8x64xbf16>, vector<64x256xbf16>, vector<8x256xf32> -> vector<8x256xf32>
    %180 = vector.extract_strided_slice %5 {offsets = [32, 0], sizes = [8, 256], strides = [1, 1]} : vector<64x256xf32> to vector<8x256xf32>
    %181 = arith.truncf %157 : vector<8x64xf32> to vector<8x64xbf16>
    %cst_46 = arith.constant dense<0.000000e+00> : vector<8x256xf32>
    %182 = tpu.matmul %181, %6, %cst_46 {dimension_numbers = #tpu.dot_dimension_numbers<[1], [0], [0], [1], [0, 0, 1, 1], [], []>} : vector<8x64xbf16>, vector<64x256xbf16>, vector<8x256xf32> -> vector<8x256xf32>
    %183 = arith.addf %180, %182 : vector<8x256xf32>
    %184 = math.tanh %183 : vector<8x256xf32>
    %185 = vector.extract_strided_slice %184 {offsets = [0, 0], sizes = [8, 192], strides = [1, 1]} : vector<8x256xf32> to vector<8x192xf32>
    %cst_47 = arith.constant 5.000000e-01 : f32
    %186 = vector.broadcast %cst_47 : f32 to vector<8x192xf32>
    %187 = arith.mulf %186, %185 : vector<8x192xf32>
    %cst_48 = arith.constant 5.000000e-01 : f32
    %188 = vector.broadcast %cst_48 : f32 to vector<8x192xf32>
    %189 = arith.addf %187, %188 : vector<8x192xf32>
    %190 = vector.extract_strided_slice %189 {offsets = [0, 0], sizes = [8, 64], strides = [1, 1]} : vector<8x192xf32> to vector<8x64xf32>
    %191 = vector.extract_strided_slice %189 {offsets = [0, 64], sizes = [8, 64], strides = [1, 1]} : vector<8x192xf32> to vector<8x64xf32>
    %192 = vector.extract_strided_slice %189 {offsets = [0, 128], sizes = [8, 64], strides = [1, 1]} : vector<8x192xf32> to vector<8x64xf32>
    %193 = vector.extract_strided_slice %184 {offsets = [0, 192], sizes = [8, 64], strides = [1, 1]} : vector<8x256xf32> to vector<8x64xf32>
    %194 = arith.mulf %191, %155 : vector<8x64xf32>
    %195 = arith.mulf %190, %193 : vector<8x64xf32>
    %196 = arith.addf %194, %195 : vector<8x64xf32>
    %197 = math.tanh %196 : vector<8x64xf32>
    %198 = arith.mulf %192, %197 : vector<8x64xf32>
    %199 = arith.truncf %198 : vector<8x64xf32> to vector<8x64xbf16>
    %cst_49 = arith.constant dense<0.000000e+00> : vector<8x256xf32>
    %200 = tpu.matmul %199, %7, %cst_49 {dimension_numbers = #tpu.dot_dimension_numbers<[1], [0], [0], [1], [0, 0, 1, 1], [], []>} : vector<8x64xbf16>, vector<64x256xbf16>, vector<8x256xf32> -> vector<8x256xf32>
    %201 = arith.addf %179, %200 : vector<8x256xf32>
    %202 = vector.broadcast %9 : vector<1x256xf32> to vector<8x256xf32>
    %203 = arith.addf %201, %202 : vector<8x256xf32>
    %204 = math.tanh %203 : vector<8x256xf32>
    %205 = vector.extract_strided_slice %204 {offsets = [0, 0], sizes = [8, 192], strides = [1, 1]} : vector<8x256xf32> to vector<8x192xf32>
    %cst_50 = arith.constant 5.000000e-01 : f32
    %206 = vector.broadcast %cst_50 : f32 to vector<8x192xf32>
    %207 = arith.mulf %206, %205 : vector<8x192xf32>
    %cst_51 = arith.constant 5.000000e-01 : f32
    %208 = vector.broadcast %cst_51 : f32 to vector<8x192xf32>
    %209 = arith.addf %207, %208 : vector<8x192xf32>
    %210 = vector.extract_strided_slice %209 {offsets = [0, 0], sizes = [8, 64], strides = [1, 1]} : vector<8x192xf32> to vector<8x64xf32>
    %211 = vector.extract_strided_slice %209 {offsets = [0, 64], sizes = [8, 64], strides = [1, 1]} : vector<8x192xf32> to vector<8x64xf32>
    %212 = vector.extract_strided_slice %209 {offsets = [0, 128], sizes = [8, 64], strides = [1, 1]} : vector<8x192xf32> to vector<8x64xf32>
    %213 = vector.extract_strided_slice %204 {offsets = [0, 192], sizes = [8, 64], strides = [1, 1]} : vector<8x256xf32> to vector<8x64xf32>
    %214 = arith.mulf %211, %175 : vector<8x64xf32>
    %215 = arith.mulf %210, %213 : vector<8x64xf32>
    %216 = arith.addf %214, %215 : vector<8x64xf32>
    %217 = math.tanh %216 : vector<8x64xf32>
    %218 = arith.mulf %212, %217 : vector<8x64xf32>
    %219 = arith.truncf %218 : vector<8x64xf32> to vector<8x64xbf16>
    %cst_52 = arith.constant dense<0.000000e+00> : vector<8x256xf32>
    %220 = tpu.matmul %219, %8, %cst_52 {dimension_numbers = #tpu.dot_dimension_numbers<[1], [0], [0], [1], [0, 0, 1, 1], [], []>} : vector<8x64xbf16>, vector<64x256xbf16>, vector<8x256xf32> -> vector<8x256xf32>
    %221 = vector.extract_strided_slice %5 {offsets = [40, 0], sizes = [8, 256], strides = [1, 1]} : vector<64x256xf32> to vector<8x256xf32>
    %222 = arith.truncf %198 : vector<8x64xf32> to vector<8x64xbf16>
    %cst_53 = arith.constant dense<0.000000e+00> : vector<8x256xf32>
    %223 = tpu.matmul %222, %6, %cst_53 {dimension_numbers = #tpu.dot_dimension_numbers<[1], [0], [0], [1], [0, 0, 1, 1], [], []>} : vector<8x64xbf16>, vector<64x256xbf16>, vector<8x256xf32> -> vector<8x256xf32>
    %224 = arith.addf %221, %223 : vector<8x256xf32>
    %225 = math.tanh %224 : vector<8x256xf32>
    %226 = vector.extract_strided_slice %225 {offsets = [0, 0], sizes = [8, 192], strides = [1, 1]} : vector<8x256xf32> to vector<8x192xf32>
    %cst_54 = arith.constant 5.000000e-01 : f32
    %227 = vector.broadcast %cst_54 : f32 to vector<8x192xf32>
    %228 = arith.mulf %227, %226 : vector<8x192xf32>
    %cst_55 = arith.constant 5.000000e-01 : f32
    %229 = vector.broadcast %cst_55 : f32 to vector<8x192xf32>
    %230 = arith.addf %228, %229 : vector<8x192xf32>
    %231 = vector.extract_strided_slice %230 {offsets = [0, 0], sizes = [8, 64], strides = [1, 1]} : vector<8x192xf32> to vector<8x64xf32>
    %232 = vector.extract_strided_slice %230 {offsets = [0, 64], sizes = [8, 64], strides = [1, 1]} : vector<8x192xf32> to vector<8x64xf32>
    %233 = vector.extract_strided_slice %230 {offsets = [0, 128], sizes = [8, 64], strides = [1, 1]} : vector<8x192xf32> to vector<8x64xf32>
    %234 = vector.extract_strided_slice %225 {offsets = [0, 192], sizes = [8, 64], strides = [1, 1]} : vector<8x256xf32> to vector<8x64xf32>
    %235 = arith.mulf %232, %196 : vector<8x64xf32>
    %236 = arith.mulf %231, %234 : vector<8x64xf32>
    %237 = arith.addf %235, %236 : vector<8x64xf32>
    %238 = math.tanh %237 : vector<8x64xf32>
    %239 = arith.mulf %233, %238 : vector<8x64xf32>
    %240 = arith.truncf %239 : vector<8x64xf32> to vector<8x64xbf16>
    %cst_56 = arith.constant dense<0.000000e+00> : vector<8x256xf32>
    %241 = tpu.matmul %240, %7, %cst_56 {dimension_numbers = #tpu.dot_dimension_numbers<[1], [0], [0], [1], [0, 0, 1, 1], [], []>} : vector<8x64xbf16>, vector<64x256xbf16>, vector<8x256xf32> -> vector<8x256xf32>
    %242 = arith.addf %220, %241 : vector<8x256xf32>
    %243 = vector.broadcast %9 : vector<1x256xf32> to vector<8x256xf32>
    %244 = arith.addf %242, %243 : vector<8x256xf32>
    %245 = math.tanh %244 : vector<8x256xf32>
    %246 = vector.extract_strided_slice %245 {offsets = [0, 0], sizes = [8, 192], strides = [1, 1]} : vector<8x256xf32> to vector<8x192xf32>
    %cst_57 = arith.constant 5.000000e-01 : f32
    %247 = vector.broadcast %cst_57 : f32 to vector<8x192xf32>
    %248 = arith.mulf %247, %246 : vector<8x192xf32>
    %cst_58 = arith.constant 5.000000e-01 : f32
    %249 = vector.broadcast %cst_58 : f32 to vector<8x192xf32>
    %250 = arith.addf %248, %249 : vector<8x192xf32>
    %251 = vector.extract_strided_slice %250 {offsets = [0, 0], sizes = [8, 64], strides = [1, 1]} : vector<8x192xf32> to vector<8x64xf32>
    %252 = vector.extract_strided_slice %250 {offsets = [0, 64], sizes = [8, 64], strides = [1, 1]} : vector<8x192xf32> to vector<8x64xf32>
    %253 = vector.extract_strided_slice %250 {offsets = [0, 128], sizes = [8, 64], strides = [1, 1]} : vector<8x192xf32> to vector<8x64xf32>
    %254 = vector.extract_strided_slice %245 {offsets = [0, 192], sizes = [8, 64], strides = [1, 1]} : vector<8x256xf32> to vector<8x64xf32>
    %255 = arith.mulf %252, %216 : vector<8x64xf32>
    %256 = arith.mulf %251, %254 : vector<8x64xf32>
    %257 = arith.addf %255, %256 : vector<8x64xf32>
    %258 = math.tanh %257 : vector<8x64xf32>
    %259 = arith.mulf %253, %258 : vector<8x64xf32>
    %260 = arith.truncf %259 : vector<8x64xf32> to vector<8x64xbf16>
    %cst_59 = arith.constant dense<0.000000e+00> : vector<8x256xf32>
    %261 = tpu.matmul %260, %8, %cst_59 {dimension_numbers = #tpu.dot_dimension_numbers<[1], [0], [0], [1], [0, 0, 1, 1], [], []>} : vector<8x64xbf16>, vector<64x256xbf16>, vector<8x256xf32> -> vector<8x256xf32>
    %262 = vector.extract_strided_slice %5 {offsets = [48, 0], sizes = [8, 256], strides = [1, 1]} : vector<64x256xf32> to vector<8x256xf32>
    %263 = arith.truncf %239 : vector<8x64xf32> to vector<8x64xbf16>
    %cst_60 = arith.constant dense<0.000000e+00> : vector<8x256xf32>
    %264 = tpu.matmul %263, %6, %cst_60 {dimension_numbers = #tpu.dot_dimension_numbers<[1], [0], [0], [1], [0, 0, 1, 1], [], []>} : vector<8x64xbf16>, vector<64x256xbf16>, vector<8x256xf32> -> vector<8x256xf32>
    %265 = arith.addf %262, %264 : vector<8x256xf32>
    %266 = math.tanh %265 : vector<8x256xf32>
    %267 = vector.extract_strided_slice %266 {offsets = [0, 0], sizes = [8, 192], strides = [1, 1]} : vector<8x256xf32> to vector<8x192xf32>
    %cst_61 = arith.constant 5.000000e-01 : f32
    %268 = vector.broadcast %cst_61 : f32 to vector<8x192xf32>
    %269 = arith.mulf %268, %267 : vector<8x192xf32>
    %cst_62 = arith.constant 5.000000e-01 : f32
    %270 = vector.broadcast %cst_62 : f32 to vector<8x192xf32>
    %271 = arith.addf %269, %270 : vector<8x192xf32>
    %272 = vector.extract_strided_slice %271 {offsets = [0, 0], sizes = [8, 64], strides = [1, 1]} : vector<8x192xf32> to vector<8x64xf32>
    %273 = vector.extract_strided_slice %271 {offsets = [0, 64], sizes = [8, 64], strides = [1, 1]} : vector<8x192xf32> to vector<8x64xf32>
    %274 = vector.extract_strided_slice %271 {offsets = [0, 128], sizes = [8, 64], strides = [1, 1]} : vector<8x192xf32> to vector<8x64xf32>
    %275 = vector.extract_strided_slice %266 {offsets = [0, 192], sizes = [8, 64], strides = [1, 1]} : vector<8x256xf32> to vector<8x64xf32>
    %276 = arith.mulf %273, %237 : vector<8x64xf32>
    %277 = arith.mulf %272, %275 : vector<8x64xf32>
    %278 = arith.addf %276, %277 : vector<8x64xf32>
    %279 = math.tanh %278 : vector<8x64xf32>
    %280 = arith.mulf %274, %279 : vector<8x64xf32>
    %281 = arith.truncf %280 : vector<8x64xf32> to vector<8x64xbf16>
    %cst_63 = arith.constant dense<0.000000e+00> : vector<8x256xf32>
    %282 = tpu.matmul %281, %7, %cst_63 {dimension_numbers = #tpu.dot_dimension_numbers<[1], [0], [0], [1], [0, 0, 1, 1], [], []>} : vector<8x64xbf16>, vector<64x256xbf16>, vector<8x256xf32> -> vector<8x256xf32>
    %283 = arith.addf %261, %282 : vector<8x256xf32>
    %284 = vector.broadcast %9 : vector<1x256xf32> to vector<8x256xf32>
    %285 = arith.addf %283, %284 : vector<8x256xf32>
    %286 = math.tanh %285 : vector<8x256xf32>
    %287 = vector.extract_strided_slice %286 {offsets = [0, 0], sizes = [8, 192], strides = [1, 1]} : vector<8x256xf32> to vector<8x192xf32>
    %cst_64 = arith.constant 5.000000e-01 : f32
    %288 = vector.broadcast %cst_64 : f32 to vector<8x192xf32>
    %289 = arith.mulf %288, %287 : vector<8x192xf32>
    %cst_65 = arith.constant 5.000000e-01 : f32
    %290 = vector.broadcast %cst_65 : f32 to vector<8x192xf32>
    %291 = arith.addf %289, %290 : vector<8x192xf32>
    %292 = vector.extract_strided_slice %291 {offsets = [0, 0], sizes = [8, 64], strides = [1, 1]} : vector<8x192xf32> to vector<8x64xf32>
    %293 = vector.extract_strided_slice %291 {offsets = [0, 64], sizes = [8, 64], strides = [1, 1]} : vector<8x192xf32> to vector<8x64xf32>
    %294 = vector.extract_strided_slice %291 {offsets = [0, 128], sizes = [8, 64], strides = [1, 1]} : vector<8x192xf32> to vector<8x64xf32>
    %295 = vector.extract_strided_slice %286 {offsets = [0, 192], sizes = [8, 64], strides = [1, 1]} : vector<8x256xf32> to vector<8x64xf32>
    %296 = arith.mulf %293, %257 : vector<8x64xf32>
    %297 = arith.mulf %292, %295 : vector<8x64xf32>
    %298 = arith.addf %296, %297 : vector<8x64xf32>
    %299 = math.tanh %298 : vector<8x64xf32>
    %300 = arith.mulf %294, %299 : vector<8x64xf32>
    %301 = arith.truncf %300 : vector<8x64xf32> to vector<8x64xbf16>
    %cst_66 = arith.constant dense<0.000000e+00> : vector<8x256xf32>
    %302 = tpu.matmul %301, %8, %cst_66 {dimension_numbers = #tpu.dot_dimension_numbers<[1], [0], [0], [1], [0, 0, 1, 1], [], []>} : vector<8x64xbf16>, vector<64x256xbf16>, vector<8x256xf32> -> vector<8x256xf32>
    %303 = vector.extract_strided_slice %5 {offsets = [56, 0], sizes = [8, 256], strides = [1, 1]} : vector<64x256xf32> to vector<8x256xf32>
    %304 = arith.truncf %280 : vector<8x64xf32> to vector<8x64xbf16>
    %cst_67 = arith.constant dense<0.000000e+00> : vector<8x256xf32>
    %305 = tpu.matmul %304, %6, %cst_67 {dimension_numbers = #tpu.dot_dimension_numbers<[1], [0], [0], [1], [0, 0, 1, 1], [], []>} : vector<8x64xbf16>, vector<64x256xbf16>, vector<8x256xf32> -> vector<8x256xf32>
    %306 = arith.addf %303, %305 : vector<8x256xf32>
    %307 = math.tanh %306 : vector<8x256xf32>
    %308 = vector.extract_strided_slice %307 {offsets = [0, 0], sizes = [8, 192], strides = [1, 1]} : vector<8x256xf32> to vector<8x192xf32>
    %cst_68 = arith.constant 5.000000e-01 : f32
    %309 = vector.broadcast %cst_68 : f32 to vector<8x192xf32>
    %310 = arith.mulf %309, %308 : vector<8x192xf32>
    %cst_69 = arith.constant 5.000000e-01 : f32
    %311 = vector.broadcast %cst_69 : f32 to vector<8x192xf32>
    %312 = arith.addf %310, %311 : vector<8x192xf32>
    %313 = vector.extract_strided_slice %312 {offsets = [0, 0], sizes = [8, 64], strides = [1, 1]} : vector<8x192xf32> to vector<8x64xf32>
    %314 = vector.extract_strided_slice %312 {offsets = [0, 64], sizes = [8, 64], strides = [1, 1]} : vector<8x192xf32> to vector<8x64xf32>
    %315 = vector.extract_strided_slice %312 {offsets = [0, 128], sizes = [8, 64], strides = [1, 1]} : vector<8x192xf32> to vector<8x64xf32>
    %316 = vector.extract_strided_slice %307 {offsets = [0, 192], sizes = [8, 64], strides = [1, 1]} : vector<8x256xf32> to vector<8x64xf32>
    %317 = arith.mulf %314, %278 : vector<8x64xf32>
    %318 = arith.mulf %313, %316 : vector<8x64xf32>
    %319 = arith.addf %317, %318 : vector<8x64xf32>
    %320 = math.tanh %319 : vector<8x64xf32>
    %321 = arith.mulf %315, %320 : vector<8x64xf32>
    %322 = arith.truncf %321 : vector<8x64xf32> to vector<8x64xbf16>
    %cst_70 = arith.constant dense<0.000000e+00> : vector<8x256xf32>
    %323 = tpu.matmul %322, %7, %cst_70 {dimension_numbers = #tpu.dot_dimension_numbers<[1], [0], [0], [1], [0, 0, 1, 1], [], []>} : vector<8x64xbf16>, vector<64x256xbf16>, vector<8x256xf32> -> vector<8x256xf32>
    %324 = arith.addf %302, %323 : vector<8x256xf32>
    %325 = vector.broadcast %9 : vector<1x256xf32> to vector<8x256xf32>
    %326 = arith.addf %324, %325 : vector<8x256xf32>
    %327 = math.tanh %326 : vector<8x256xf32>
    %328 = vector.extract_strided_slice %327 {offsets = [0, 0], sizes = [8, 192], strides = [1, 1]} : vector<8x256xf32> to vector<8x192xf32>
    %cst_71 = arith.constant 5.000000e-01 : f32
    %329 = vector.broadcast %cst_71 : f32 to vector<8x192xf32>
    %330 = arith.mulf %329, %328 : vector<8x192xf32>
    %cst_72 = arith.constant 5.000000e-01 : f32
    %331 = vector.broadcast %cst_72 : f32 to vector<8x192xf32>
    %332 = arith.addf %330, %331 : vector<8x192xf32>
    %333 = vector.extract_strided_slice %332 {offsets = [0, 0], sizes = [8, 64], strides = [1, 1]} : vector<8x192xf32> to vector<8x64xf32>
    %334 = vector.extract_strided_slice %332 {offsets = [0, 64], sizes = [8, 64], strides = [1, 1]} : vector<8x192xf32> to vector<8x64xf32>
    %335 = vector.extract_strided_slice %332 {offsets = [0, 128], sizes = [8, 64], strides = [1, 1]} : vector<8x192xf32> to vector<8x64xf32>
    %336 = vector.extract_strided_slice %327 {offsets = [0, 192], sizes = [8, 64], strides = [1, 1]} : vector<8x256xf32> to vector<8x64xf32>
    %337 = arith.mulf %334, %298 : vector<8x64xf32>
    %338 = arith.mulf %333, %336 : vector<8x64xf32>
    %339 = arith.addf %337, %338 : vector<8x64xf32>
    %340 = math.tanh %339 : vector<8x64xf32>
    %341 = arith.mulf %335, %340 : vector<8x64xf32>
    %342 = arith.truncf %341 : vector<8x64xf32> to vector<8x64xbf16>
    %c0_73 = arith.constant 0 : index
    %c0_74 = arith.constant 0 : index
    %343 = vector.load %arg7[%c0_73, %c0_74] : memref<64x64xbf16, #tpu.memory_space<vmem>>, vector<64x64xbf16>
    %cst_75 = arith.constant dense<0.000000e+00> : vector<8x64xf32>
    %344 = tpu.matmul %342, %343, %cst_75 {dimension_numbers = #tpu.dot_dimension_numbers<[1], [0], [0], [1], [0, 0, 1, 1], [], []>} : vector<8x64xbf16>, vector<64x64xbf16>, vector<8x64xf32> -> vector<8x64xf32>
    %c0_76 = arith.constant 0 : index
    %c0_77 = arith.constant 0 : index
    %345 = vector.load %arg8[%c0_76, %c0_77] : memref<1x64xf32, #tpu.memory_space<vmem>>, vector<1x64xf32>
    %346 = vector.broadcast %345 : vector<1x64xf32> to vector<8x64xf32>
    %347 = arith.addf %344, %346 : vector<8x64xf32>
    %cst_78 = arith.constant 0.000000e+00 : f32
    %348 = vector.broadcast %cst_78 : f32 to vector<8x64xf32>
    %349 = arith.maximumf %347, %348 : vector<8x64xf32>
    %350 = arith.truncf %349 : vector<8x64xf32> to vector<8x64xbf16>
    %c0_79 = arith.constant 0 : index
    %c0_80 = arith.constant 0 : index
    %351 = vector.load %arg9[%c0_79, %c0_80] : memref<64x64xbf16, #tpu.memory_space<vmem>>, vector<64x64xbf16>
    %cst_81 = arith.constant dense<0.000000e+00> : vector<8x64xf32>
    %352 = tpu.matmul %350, %351, %cst_81 {dimension_numbers = #tpu.dot_dimension_numbers<[1], [0], [0], [1], [0, 0, 1, 1], [], []>} : vector<8x64xbf16>, vector<64x64xbf16>, vector<8x64xf32> -> vector<8x64xf32>
    %c0_82 = arith.constant 0 : index
    %c0_83 = arith.constant 0 : index
    %353 = vector.load %arg10[%c0_82, %c0_83] : memref<1x64xf32, #tpu.memory_space<vmem>>, vector<1x64xf32>
    %354 = vector.broadcast %353 : vector<1x64xf32> to vector<8x64xf32>
    %355 = arith.addf %352, %354 : vector<8x64xf32>
    %cst_84 = arith.constant 0.000000e+00 : f32
    %356 = vector.broadcast %cst_84 : f32 to vector<8x64xf32>
    %357 = arith.maximumf %355, %356 : vector<8x64xf32>
    %358 = arith.truncf %357 : vector<8x64xf32> to vector<8x64xbf16>
    %c0_85 = arith.constant 0 : index
    %c0_86 = arith.constant 0 : index
    %359 = vector.load %arg11[%c0_85, %c0_86] : memref<64x128xbf16, #tpu.memory_space<vmem>>, vector<64x128xbf16>
    %cst_87 = arith.constant dense<0.000000e+00> : vector<8x128xf32>
    %360 = tpu.matmul %358, %359, %cst_87 {dimension_numbers = #tpu.dot_dimension_numbers<[1], [0], [0], [1], [0, 0, 1, 1], [], []>} : vector<8x64xbf16>, vector<64x128xbf16>, vector<8x128xf32> -> vector<8x128xf32>
    %c0_88 = arith.constant 0 : index
    %c0_89 = arith.constant 0 : index
    %361 = vector.load %arg12[%c0_88, %c0_89] : memref<1x128xf32, #tpu.memory_space<vmem>>, vector<1x128xf32>
    %362 = vector.broadcast %361 : vector<1x128xf32> to vector<8x128xf32>
    %363 = arith.addf %360, %362 : vector<8x128xf32>
    %c0_90 = arith.constant 0 : index
    %c0_91 = arith.constant 0 : index
    %364 = vector.load %arg13[%c0_90, %c0_91] : memref<8x128xf32, #tpu.memory_space<vmem>>, vector<8x128xf32>
    tpu.vector_store %arg13[%c0_90, %c0_91], %363 {strides = array<i32>} : memref<8x128xf32, #tpu.memory_space<vmem>>, vector<8x128xf32>,
    return
  }
}

</mosaic_0001>

<llo_original>
// kernel: tpu_custom_call.1
$region0: #{tpu_custom_call.1}
  #allocation0 [shape = 'u32[]', space=smem, size = 0x4, offset = 0x4, fixed_abs, tag = 'smem constant byte address 0x4 - core index']
  #allocation1 [shape = 'u32[144,128]{1,0:T(1,128)}', space=vmem, size = 0x12000, scoped, tag = 'internal scratch']
  %s0 = inlined_call_operand.vmem [shape: bf16[64,22], index: 0, kind: input, shape index: {}]
  %s1 = inlined_call_operand.hbm [shape: bf16[22,256], index: 1, kind: input, shape index: {}]
  %s2 = inlined_call_operand.hbm [shape: bf16[64,256], index: 2, kind: input, shape index: {}]
  %s3 = inlined_call_operand.vmem [shape: f32[1,256], index: 3, kind: input, shape index: {}]
  %s4 = inlined_call_operand.hbm [shape: bf16[64,256], index: 4, kind: input, shape index: {}]
  %s5 = inlined_call_operand.hbm [shape: bf16[64,256], index: 5, kind: input, shape index: {}]
  %s6 = inlined_call_operand.hbm [shape: f32[1,256], index: 6, kind: input, shape index: {}]
  %s7 = inlined_call_operand.vmem [shape: bf16[64,64], index: 7, kind: input, shape index: {}]
  %s8 = inlined_call_operand.vmem [shape: f32[1,64], index: 8, kind: input, shape index: {}]
  %s9 = inlined_call_operand.vmem [shape: bf16[64,64], index: 9, kind: input, shape index: {}]
  %s10 = inlined_call_operand.vmem [shape: f32[1,64], index: 10, kind: input, shape index: {}]
  %s11 = inlined_call_operand.hbm [shape: bf16[64,128], index: 11, kind: input, shape index: {}]
  %s12 = inlined_call_operand.vmem [shape: f32[1,128], index: 12, kind: input, shape index: {}]
  %s13 = inlined_call_operand.hbm [shape: f32[8,128], index: 13, kind: output, shape index: {}]
  %s14 = sld [smem:[#allocation0]]
  $region86: #{tpu_custom_call.1} parent=0
    _
  %s16 = ssub.s32 1, %s14
  %s17 = scalar_select 0, %s16, %s14
  $region1: #{tpu_custom_call.1} parent=0
    #allocation2 [shape = 'u8[12288]{0}', space=vmem, size = 0x3000, scoped, tag = 'input window, operand 1, single buffered']
    #allocation3 [shape = 's32[1]{0}', space=sflag, size = 0x4, scoped, tag = 'scoped memory for tpu_custom_call.1']
    #allocation4 [shape = 's32[1]{0}', space=sflag, size = 0x4, scoped, tag = 'scoped memory for tpu_custom_call.1']
    #allocation5 [shape = 'u8[32768]{0}', space=vmem, size = 0x8000, scoped, tag = 'input window, operand 2, single buffered']
    #allocation6 [shape = 's32[1]{0}', space=sflag, size = 0x4, scoped, tag = 'scoped memory for tpu_custom_call.1']
    #allocation7 [shape = 'u8[32768]{0}', space=vmem, size = 0x8000, scoped, tag = 'input window, operand 4, single buffered']
    #allocation8 [shape = 'u8[32768]{0}', space=vmem, size = 0x8000, scoped, tag = 'input window, operand 5, single buffered']
    #allocation9 [shape = 's32[1]{0}', space=sflag, size = 0x4, scoped, tag = 'scoped memory for tpu_custom_call.1']
    #allocation10 [shape = 'u8[1024]{0}', space=vmem, size = 0x400, scoped, tag = 'input window, operand 6, single buffered']
    #allocation11 [shape = 'u8[16384]{0}', space=vmem, size = 0x4000, scoped, tag = 'input window, operand 11, single buffered']
    #allocation12 [shape = 's32[1]{0}', space=sflag, size = 0x4, scoped, tag = 'scoped memory for tpu_custom_call.1']
    #allocation13 [shape = 'u8[4096]{0}', space=vmem, size = 0x1000, scoped, tag = 'output window, operand 0, single buffered']
    %18 = vsyncpa [#allocation3], 0
    %19 = vsyncpa [#allocation6], 0
    %20 = vsyncpa [#allocation9], 0
    %21 = vsyncpa [#allocation12], 0
    %22 = vsyncpa [#allocation4], 0
    // Predicated region
    $region2: #{tpu_custom_call.1} parent=1 // pred_check
      _
    $region3: #{tpu_custom_call.1} parent=1 // pred_check_branch
      %24 = sbr.rel (0) target = $region5
    $region4: #{tpu_custom_call.1} parent=1 // pred_region
      _
    $region5: #{tpu_custom_call.1} parent=1 // pred_fallthru
      _
    // Predicated region
    $region6: #{tpu_custom_call.1} parent=1 // pred_check
      _
    $region7: #{tpu_custom_call.1} parent=1 // pred_check_branch
      %26 = sbr.rel (0) target = $region9
    $region8: #{tpu_custom_call.1} parent=1 // pred_region
      %s28 = ssub.s32 384, 384
      %29 = vsyncadd [#allocation3], %s28
      %s30 = sshll.u32 [#allocation2], 4
      %s31 = int_to_ptr.vmem [resolvable:$true] %s30
      %36 = dma.hbm_to_vmem [thread:$0]  %s1, 384, %s31, [#allocation3], 128, 128, 8
    $region9: #{tpu_custom_call.1} parent=1 // pred_fallthru
      _
    // Predicated region
    $region10: #{tpu_custom_call.1} parent=1 // pred_check
      _
    $region11: #{tpu_custom_call.1} parent=1 // pred_check_branch
      %38 = sbr.rel (0) target = $region13
    $region12: #{tpu_custom_call.1} parent=1 // pred_region
      %s40 = ssub.s32 1024, 1024
      %41 = vsyncadd [#allocation6], %s40
      %s42 = sshll.u32 [#allocation5], 4
      %s43 = int_to_ptr.vmem [resolvable:$true] %s42
      %48 = dma.hbm_to_vmem [thread:$0]  %s2, 1024, %s43, [#allocation6], 128, 128, 8
    $region13: #{tpu_custom_call.1} parent=1 // pred_fallthru
      _
    // Predicated region
    $region14: #{tpu_custom_call.1} parent=1 // pred_check
      _
    $region15: #{tpu_custom_call.1} parent=1 // pred_check_branch
      %50 = sbr.rel (0) target = $region17
    $region16: #{tpu_custom_call.1} parent=1 // pred_region
      _
    $region17: #{tpu_custom_call.1} parent=1 // pred_fallthru
      _
    // Predicated region
    $region18: #{tpu_custom_call.1} parent=1 // pred_check
      _
    $region19: #{tpu_custom_call.1} parent=1 // pred_check_branch
      %52 = sbr.rel (0) target = $region21
    $region20: #{tpu_custom_call.1} parent=1 // pred_region
      %s54 = ssub.s32 1024, 1024
      %55 = vsyncadd [#allocation6], %s54
      %s56 = sshll.u32 [#allocation7], 4
      %s57 = int_to_ptr.vmem [resolvable:$true] %s56
      %62 = dma.hbm_to_vmem [thread:$0]  %s4, 1024, %s57, [#allocation6], 128, 128, 8
    $region21: #{tpu_custom_call.1} parent=1 // pred_fallthru
      _
    // Predicated region
    $region22: #{tpu_custom_call.1} parent=1 // pred_check
      _
    $region23: #{tpu_custom_call.1} parent=1 // pred_check_branch
      %64 = sbr.rel (0) target = $region25
    $region24: #{tpu_custom_call.1} parent=1 // pred_region
      %s66 = ssub.s32 1024, 1024
      %67 = vsyncadd [#allocation9], %s66
      %s68 = sshll.u32 [#allocation8], 4
      %s69 = int_to_ptr.vmem [resolvable:$true] %s68
      %74 = dma.hbm_to_vmem [thread:$0]  %s5, 1024, %s69, [#allocation9], 128, 128, 8
    $region25: #{tpu_custom_call.1} parent=1 // pred_fallthru
      _
    // Predicated region
    $region26: #{tpu_custom_call.1} parent=1 // pred_check
      _
    $region27: #{tpu_custom_call.1} parent=1 // pred_check_branch
      %76 = sbr.rel (0) target = $region29
    $region28: #{tpu_custom_call.1} parent=1 // pred_region
      %s78 = ssub.s32 32, 32
      %79 = vsyncadd [#allocation9], %s78
      %s81 = sshll.u32 [#allocation10], 4
      %s82 = int_to_ptr.vmem [resolvable:$true] %s81
      %84 = dma.hbm_to_vmem [thread:$0]  %s6, 32, %s82, [#allocation9]
    $region29: #{tpu_custom_call.1} parent=1 // pred_fallthru
      _
    // Predicated region
    $region30: #{tpu_custom_call.1} parent=1 // pred_check
      _
    $region31: #{tpu_custom_call.1} parent=1 // pred_check_branch
      %86 = sbr.rel (0) target = $region33
    $region32: #{tpu_custom_call.1} parent=1 // pred_region
      _
    $region33: #{tpu_custom_call.1} parent=1 // pred_fallthru
      _
    // Predicated region
    $region34: #{tpu_custom_call.1} parent=1 // pred_check
      _
    $region35: #{tpu_custom_call.1} parent=1 // pred_check_branch
      %88 = sbr.rel (0) target = $region37
    $region36: #{tpu_custom_call.1} parent=1 // pred_region
      _
    $region37: #{tpu_custom_call.1} parent=1 // pred_fallthru
      _
    // Predicated region
    $region38: #{tpu_custom_call.1} parent=1 // pred_check
      _
    $region39: #{tpu_custom_call.1} parent=1 // pred_check_branch
      %90 = sbr.rel (0) target = $region41
    $region40: #{tpu_custom_call.1} parent=1 // pred_region
      _
    $region41: #{tpu_custom_call.1} parent=1 // pred_fallthru
      _
    // Predicated region
    $region42: #{tpu_custom_call.1} parent=1 // pred_check
      _
    $region43: #{tpu_custom_call.1} parent=1 // pred_check_branch
      %92 = sbr.rel (0) target = $region45
    $region44: #{tpu_custom_call.1} parent=1 // pred_region
      _
    $region45: #{tpu_custom_call.1} parent=1 // pred_fallthru
      _
    // Predicated region
    $region46: #{tpu_custom_call.1} parent=1 // pred_check
      _
    $region47: #{tpu_custom_call.1} parent=1 // pred_check_branch
      %94 = sbr.rel (0) target = $region49
    $region48: #{tpu_custom_call.1} parent=1 // pred_region
      %s96 = ssub.s32 512, 512
      %97 = vsyncadd [#allocation12], %s96
      %s98 = sshll.u32 [#allocation11], 4
      %s99 = int_to_ptr.vmem [resolvable:$true] %s98
      %104 = dma.hbm_to_vmem [thread:$0]  %s11, 512, %s99, [#allocation12], 64, 64, 4
    $region49: #{tpu_custom_call.1} parent=1 // pred_fallthru
      _
    // Predicated region
    $region50: #{tpu_custom_call.1} parent=1 // pred_check
      _
    $region51: #{tpu_custom_call.1} parent=1 // pred_check_branch
      %106 = sbr.rel (0) target = $region53
    $region52: #{tpu_custom_call.1} parent=1 // pred_region
      _
    $region53: #{tpu_custom_call.1} parent=1 // pred_fallthru
      _
    // Predicated region
    $region54: #{tpu_custom_call.1} parent=1 // pred_check
      _
    $region55: #{tpu_custom_call.1} parent=1 // pred_check_branch
      %108 = sbr.rel (0) target = $region57
    $region56: #{tpu_custom_call.1} parent=1 // pred_region
      %109 = dma.done [#allocation3], 384
    $region57: #{tpu_custom_call.1} parent=1 // pred_fallthru
      _
    // Predicated region
    $region58: #{tpu_custom_call.1} parent=1 // pred_check
      _
    $region59: #{tpu_custom_call.1} parent=1 // pred_check_branch
      %111 = sbr.rel (0) target = $region61
    $region60: #{tpu_custom_call.1} parent=1 // pred_region
      %112 = dma.done [#allocation6], 1024
    $region61: #{tpu_custom_call.1} parent=1 // pred_fallthru
      _
    // Predicated region
    $region62: #{tpu_custom_call.1} parent=1 // pred_check
      _
    $region63: #{tpu_custom_call.1} parent=1 // pred_check_branch
      %114 = sbr.rel (0) target = $region65
    $region64: #{tpu_custom_call.1} parent=1 // pred_region
      %115 = dma.done [#allocation6], 1024
    $region65: #{tpu_custom_call.1} parent=1 // pred_fallthru
      _
    // Predicated region
    $region66: #{tpu_custom_call.1} parent=1 // pred_check
      _
    $region67: #{tpu_custom_call.1} parent=1 // pred_check_branch
      %117 = sbr.rel (0) target = $region69
    $region68: #{tpu_custom_call.1} parent=1 // pred_region
      %118 = dma.done [#allocation9], 1024
    $region69: #{tpu_custom_call.1} parent=1 // pred_fallthru
      _
    // Predicated region
    $region70: #{tpu_custom_call.1} parent=1 // pred_check
      _
    $region71: #{tpu_custom_call.1} parent=1 // pred_check_branch
      %120 = sbr.rel (0) target = $region73
    $region72: #{tpu_custom_call.1} parent=1 // pred_region
      %121 = dma.done [#allocation9], 32
    $region73: #{tpu_custom_call.1} parent=1 // pred_fallthru
      _
    // Predicated region
    $region74: #{tpu_custom_call.1} parent=1 // pred_check
      _
    $region75: #{tpu_custom_call.1} parent=1 // pred_check_branch
      %123 = sbr.rel (0) target = $region77
    $region76: #{tpu_custom_call.1} parent=1 // pred_region
      %124 = dma.done [#allocation12], 512
    $region77: #{tpu_custom_call.1} parent=1 // pred_fallthru
      _
    %v126 = vld [vmem:[%s0] sm:$0xf]
    %v127 = vld [vmem:[%s0 + $0x4] sm:$0xf]
    %v128 = vld [vmem:[%s0 + $0x8] sm:$0xf]
    %v129 = vld [vmem:[%s0 + $0xc] sm:$0xf]
    %v130 = vld [vmem:[%s0 + $0x10] sm:$0xf]
    %v131 = vld [vmem:[%s0 + $0x14] sm:$0xf]
    %v132 = vld [vmem:[%s0 + $0x18] sm:$0xf]
    %v133 = vld [vmem:[%s0 + $0x1c] sm:$0xf]
    %v134 = vld [vmem:[#allocation2] sm:$0xff]
    %v135 = vld [vmem:[#allocation2 + $0x8] sm:$0xff]
    %v136 = vld [vmem:[#allocation2 + $0x10] sm:$0x77]
    %v137 = vld [vmem:[%s3] sm:$0x3]
    %v139 = vlaneseq
    %v140 = vshrl.u32 %v139, 7
    %v141 = vsub.s32 0, %v140
    %v142 = vrot.slane %v137, %v141
    %v143 = vlaneseq
    %v144 = vshrl.u32 %v143, 7
    %v145 = vsub.s32 1, %v144
    %v146 = vrot.slane %v137, %v145
    %v157 = vunpack.c.l.b16 %v126
    %v158 = vunpack.c.l.b16 %v127
    %v159 = vunpack.c.l.b16 %v128
    %v160 = vunpack.c.l.b16 %v129
    %v161 = vunpack.c.l.b16 %v130
    %v162 = vunpack.c.l.b16 %v131
    %v163 = vunpack.c.l.b16 %v132
    %v164 = vunpack.c.l.b16 %v133
    %v165 = vpack.c.b16 %v158, %v157
    %v166 = vpack.c.b16 %v160, %v159
    %v167 = vpack.c.b16 %v162, %v161
    %v168 = vpack.c.b16 %v164, %v163
    %v172 = vunpack.c.l.b16 %v134
    %v173 = vunpack.c.h.b16 %v134
    %v174 = vunpack.c.l.b16 %v135
    %v175 = vunpack.c.h.b16 %v135
    %v176 = vunpack.c.l.b16 %v136
    %v177 = vunpack.c.h.b16 %v136
    %v178 = vpack.c.b16 %v174, %v172
    %v179 = vpack.c.b16 %v175, %v173
    %v180 = vpack.c.b16 %v176, %v176
    %v181 = vpack.c.b16 %v177, %v177
    %vm184 = vcmask 179200
    %v186 = vsel %vm184, %v165, 0
    %v189 = vsel %vm184, %v166, 0
    %v192 = vsel %vm184, %v167, 0
    %v195 = vsel %vm184, %v168, 0
    %vm197 = vcmask 1042432
    %v199 = vsel %vm197, %v180, 0
    %v202 = vsel %vm197, %v181, 0
    %204 = vmatprep.subr.bf16.mxu0 %v179
    %205 = vmatpush1.bf16.msra.mxu0 %v178
    %206 = vmatprep.subr.bf16.mxu0 %v202
    %207 = vmatpush1.bf16.msra.mxu0 %v199
    %208 = vmatprep.subr.bf16.mxu0 0
    %209 = vmatpush1.bf16.msra.mxu0 0
    %210 = vmatprep.subr.bf16.mxu0 0
    %211 = vmatpush1.bf16.msra.mxu0 0
    %212 = vmatprep.subr.bf16.mxu0 0
    %213 = vmatpush1.bf16.msra.mxu0 0
    %214 = vmatprep.subr.bf16.mxu0 0
    %215 = vmatpush1.bf16.msra.mxu0 0
    %216 = vmatprep.subr.bf16.mxu0 0
    %217 = vmatpush1.bf16.msra.mxu0 0
    %218 = vmatprep.subr.bf16.mxu0 0
    %219 = vmatpush1.bf16.msra.mxu0 0
    %220 = vmatprep.subr.bf16.mxu0 0
    %221 = vmatpush1.bf16.msra.mxu0 0
    %222 = vmatprep.subr.bf16.mxu0 0
    %223 = vmatpush1.bf16.msra.mxu0 0
    %224 = vmatprep.subr.bf16.mxu0 0
    %225 = vmatpush1.bf16.msra.mxu0 0
    %226 = vmatprep.subr.bf16.mxu0 0
    %227 = vmatpush1.bf16.msra.mxu0 0
    %228 = vmatprep.subr.bf16.mxu0 0
    %229 = vmatpush1.bf16.msra.mxu0 0
    %230 = vmatprep.subr.bf16.mxu0 0
    %231 = vmatpush1.bf16.msra.mxu0 0
    %232 = vmatprep.subr.bf16.mxu0 0
    %233 = vmatpush1.bf16.msra.mxu0 0
    %234 = vmatprep.subr.bf16.mxu0 0
    %235 = vmatpush1.bf16.msra.mxu0 0
    %236 = vmatprep.mubr.bf16.mxu0 0
    %237 = vmatmul.mubr.bf16.gmra.mrb[0].mxu0 %v186
    %v238 = vpop.f32.mrb[0].mxu0
    %v239 = vadd.f32 %v142, %v238
    %v240 = vpop.f32.mrb[0].mxu0
    %v241 = vadd.f32 %v146, %v240
    %v242 = vpop.f32.mrb[0].mxu0
    %v243 = vadd.f32 %v142, %v242
    %v244 = vpop.f32.mrb[0].mxu0
    %v245 = vadd.f32 %v146, %v244
    %246 = vmatprep.mubr.bf16.mxu0 0
    %247 = vmatmul.mubr.bf16.gmra.mrb[0].mxu0 %v189
    %v248 = vpop.f32.mrb[0].mxu0
    %v249 = vadd.f32 %v142, %v248
    %v250 = vpop.f32.mrb[0].mxu0
    %v251 = vadd.f32 %v146, %v250
    %v252 = vpop.f32.mrb[0].mxu0
    %v253 = vadd.f32 %v142, %v252
    %v254 = vpop.f32.mrb[0].mxu0
    %v255 = vadd.f32 %v146, %v254
    %256 = vmatprep.mubr.bf16.mxu0 0
    %257 = vmatmul.mubr.bf16.gmra.mrb[0].mxu0 %v192
    %v258 = vpop.f32.mrb[0].mxu0
    %v259 = vadd.f32 %v142, %v258
    %v260 = vpop.f32.mrb[0].mxu0
    %v261 = vadd.f32 %v146, %v260
    %v262 = vpop.f32.mrb[0].mxu0
    %v263 = vadd.f32 %v142, %v262
    %v264 = vpop.f32.mrb[0].mxu0
    %v265 = vadd.f32 %v146, %v264
    %266 = vmatprep.mubr.bf16.mxu0 0
    %267 = vmatmul.mubr.bf16.gmra.mrb[0].mxu0 %v195
    %v268 = vpop.f32.mrb[0].mxu0
    %v269 = vadd.f32 %v142, %v268
    %v270 = vpop.f32.mrb[0].mxu0
    %v271 = vadd.f32 %v146, %v270
    %v272 = vpop.f32.mrb[0].mxu0
    %v273 = vadd.f32 %v142, %v272
    %v274 = vpop.f32.mrb[0].mxu0
    %v275 = vadd.f32 %v146, %v274
    %276 = vdwg.mxu0
    %v277 = vld [vmem:[#allocation5] sm:$0xff]
    %v278 = vld [vmem:[#allocation5 + $0x8] sm:$0xff]
    %v279 = vld [vmem:[#allocation5 + $0x10] sm:$0xff]
    %v280 = vld [vmem:[#allocation5 + $0x18] sm:$0xff]
    %v281 = vld [vmem:[#allocation5 + $0x20] sm:$0xff]
    %v282 = vld [vmem:[#allocation5 + $0x28] sm:$0xff]
    %v283 = vld [vmem:[#allocation5 + $0x30] sm:$0xff]
    %v284 = vld [vmem:[#allocation5 + $0x38] sm:$0xff]
    %v285 = vld [vmem:[#allocation7] sm:$0xff]
    %v286 = vld [vmem:[#allocation7 + $0x8] sm:$0xff]
    %v287 = vld [vmem:[#allocation7 + $0x10] sm:$0xff]
    %v288 = vld [vmem:[#allocation7 + $0x18] sm:$0xff]
    %v289 = vld [vmem:[#allocation7 + $0x20] sm:$0xff]
    %v290 = vld [vmem:[#allocation7 + $0x28] sm:$0xff]
    %v291 = vld [vmem:[#allocation7 + $0x30] sm:$0xff]
    %v292 = vld [vmem:[#allocation7 + $0x38] sm:$0xff]
    %v293 = vld [vmem:[#allocation8] sm:$0xff]
    %v294 = vld [vmem:[#allocation8 + $0x8] sm:$0xff]
    %v295 = vld [vmem:[#allocation8 + $0x10] sm:$0xff]
    %v296 = vld [vmem:[#allocation8 + $0x18] sm:$0xff]
    %v297 = vld [vmem:[#allocation8 + $0x20] sm:$0xff]
    %v298 = vld [vmem:[#allocation8 + $0x28] sm:$0xff]
    %v299 = vld [vmem:[#allocation8 + $0x30] sm:$0xff]
    %v300 = vld [vmem:[#allocation8 + $0x38] sm:$0xff]
    %v301 = vld [vmem:[#allocation10] sm:$0x3]
    %v310 = vunpack.c.l.b16 %v277
    %v311 = vunpack.c.h.b16 %v277
    %v312 = vunpack.c.l.b16 %v278
    %v313 = vunpack.c.h.b16 %v278
    %v314 = vunpack.c.l.b16 %v279
    %v315 = vunpack.c.h.b16 %v279
    %v316 = vunpack.c.l.b16 %v280
    %v317 = vunpack.c.h.b16 %v280
    %v318 = vunpack.c.l.b16 %v281
    %v319 = vunpack.c.h.b16 %v281
    %v320 = vunpack.c.l.b16 %v282
    %v321 = vunpack.c.h.b16 %v282
    %v322 = vunpack.c.l.b16 %v283
    %v323 = vunpack.c.h.b16 %v283
    %v324 = vunpack.c.l.b16 %v284
    %v325 = vunpack.c.h.b16 %v284
    %v326 = vpack.c.b16 %v312, %v310
    %v327 = vpack.c.b16 %v313, %v311
    %v328 = vpack.c.b16 %v316, %v314
    %v329 = vpack.c.b16 %v317, %v315
    %v330 = vpack.c.b16 %v320, %v318
    %v331 = vpack.c.b16 %v321, %v319
    %v332 = vpack.c.b16 %v324, %v322
    %v333 = vpack.c.b16 %v325, %v323
    %vm342 = vcmask 523264
    %v344 = vsel %vm342, 0, 0
    %346 = vmatprep.subr.bf16.mxu0 %v327
    %347 = vmatpush1.bf16.msra.mxu0 %v326
    %348 = vmatprep.subr.bf16.mxu0 %v329
    %349 = vmatpush1.bf16.msra.mxu0 %v328
    %350 = vmatprep.subr.bf16.mxu0 %v331
    %351 = vmatpush1.bf16.msra.mxu0 %v330
    %352 = vmatprep.subr.bf16.mxu0 %v333
    %353 = vmatpush1.bf16.msra.mxu0 %v332
    %354 = vmatprep.subr.bf16.mxu0 0
    %355 = vmatpush1.bf16.msra.mxu0 0
    %356 = vmatprep.subr.bf16.mxu0 0
    %357 = vmatpush1.bf16.msra.mxu0 0
    %358 = vmatprep.subr.bf16.mxu0 0
    %359 = vmatpush1.bf16.msra.mxu0 0
    %360 = vmatprep.subr.bf16.mxu0 0
    %361 = vmatpush1.bf16.msra.mxu0 0
    %362 = vmatprep.subr.bf16.mxu0 0
    %363 = vmatpush1.bf16.msra.mxu0 0
    %364 = vmatprep.subr.bf16.mxu0 0
    %365 = vmatpush1.bf16.msra.mxu0 0
    %366 = vmatprep.subr.bf16.mxu0 0
    %367 = vmatpush1.bf16.msra.mxu0 0
    %368 = vmatprep.subr.bf16.mxu0 0
    %369 = vmatpush1.bf16.msra.mxu0 0
    %370 = vmatprep.subr.bf16.mxu0 0
    %371 = vmatpush1.bf16.msra.mxu0 0
    %372 = vmatprep.subr.bf16.mxu0 0
    %373 = vmatpush1.bf16.msra.mxu0 0
    %374 = vmatprep.subr.bf16.mxu0 0
    %375 = vmatpush1.bf16.msra.mxu0 0
    %376 = vmatprep.subr.bf16.mxu0 0
    %377 = vmatpush1.bf16.msra.mxu0 0
    %378 = vmatprep.mubr.bf16.mxu0 0
    %379 = vmatmul.mubr.bf16.gmra.mrb[0].mxu0 %v344
    %v380 = vpop.f32.mrb[0].mxu0
    %v381 = vadd.f32 0.0, %v380
    %v382 = vpop.f32.mrb[0].mxu0
    %v383 = vadd.f32 0.0, %v382
    %v384 = vpop.f32.mrb[0].mxu0
    %v385 = vpop.f32.mrb[0].mxu0
    %386 = vdwg.mxu0
    %v387 = vadd.f32 %v239, %v381
    %v388 = vadd.f32 %v241, %v383
    %v389 = vtanh.pop %v387
    %v390 = vtanh.pop %v388
    %v391 = vmul.f32 %v389, 0.5
    %v392 = vmul.f32 %v390, 0.5
    %v393 = vadd.f32 %v391, 0.5
    %v394 = vadd.f32 %v392, 0.5
    %v395 = vmul.f32 %v393, 0.0
    %397 = vrot.lane.b32.xlu0 %v390, 64
    %v398 = vpop.permute.xlu0 %397
    %v400 = vmul.f32 %v393, %v398
    %402 = vrot.lane.b32.xlu0 %v400, 64
    %v403 = vpop.permute.xlu0 %402
    %v405 = vadd.f32 %v395, %v403
    %v406 = vtanh.pop %v405
    %408 = vrot.lane.b32.xlu0 %v406, 64
    %v409 = vpop.permute.xlu0 %408
    %v411 = vmul.f32 %v394, %v409
    %v412 = vpack.c.bf16 %v411, %v411
    %v421 = vunpack.c.l.b16 %v285
    %v422 = vunpack.c.h.b16 %v285
    %v423 = vunpack.c.l.b16 %v286
    %v424 = vunpack.c.h.b16 %v286
    %v425 = vunpack.c.l.b16 %v287
    %v426 = vunpack.c.h.b16 %v287
    %v427 = vunpack.c.l.b16 %v288
    %v428 = vunpack.c.h.b16 %v288
    %v429 = vunpack.c.l.b16 %v289
    %v430 = vunpack.c.h.b16 %v289
    %v431 = vunpack.c.l.b16 %v290
    %v432 = vunpack.c.h.b16 %v290
    %v433 = vunpack.c.l.b16 %v291
    %v434 = vunpack.c.h.b16 %v291
    %v435 = vunpack.c.l.b16 %v292
    %v436 = vunpack.c.h.b16 %v292
    %v437 = vpack.c.b16 %v423, %v421
    %v438 = vpack.c.b16 %v424, %v422
    %v439 = vpack.c.b16 %v427, %v425
    %v440 = vpack.c.b16 %v428, %v426
    %v441 = vpack.c.b16 %v431, %v429
    %v442 = vpack.c.b16 %v432, %v430
    %v443 = vpack.c.b16 %v435, %v433
    %v444 = vpack.c.b16 %v436, %v434
    %v454 = vsel %vm342, %v412, 0
    %456 = vmatprep.subr.bf16.mxu0 %v438
    %457 = vmatpush1.bf16.msra.mxu0 %v437
    %458 = vmatprep.subr.bf16.mxu0 %v440
    %459 = vmatpush1.bf16.msra.mxu0 %v439
    %460 = vmatprep.subr.bf16.mxu0 %v442
    %461 = vmatpush1.bf16.msra.mxu0 %v441
    %462 = vmatprep.subr.bf16.mxu0 %v444
    %463 = vmatpush1.bf16.msra.mxu0 %v443
    %464 = vmatprep.subr.bf16.mxu0 0
    %465 = vmatpush1.bf16.msra.mxu0 0
    %466 = vmatprep.subr.bf16.mxu0 0
    %467 = vmatpush1.bf16.msra.mxu0 0
    %468 = vmatprep.subr.bf16.mxu0 0
    %469 = vmatpush1.bf16.msra.mxu0 0
    %470 = vmatprep.subr.bf16.mxu0 0
    %471 = vmatpush1.bf16.msra.mxu0 0
    %472 = vmatprep.subr.bf16.mxu0 0
    %473 = vmatpush1.bf16.msra.mxu0 0
    %474 = vmatprep.subr.bf16.mxu0 0
    %475 = vmatpush1.bf16.msra.mxu0 0
    %476 = vmatprep.subr.bf16.mxu0 0
    %477 = vmatpush1.bf16.msra.mxu0 0
    %478 = vmatprep.subr.bf16.mxu0 0
    %479 = vmatpush1.bf16.msra.mxu0 0
    %480 = vmatprep.subr.bf16.mxu0 0
    %481 = vmatpush1.bf16.msra.mxu0 0
    %482 = vmatprep.subr.bf16.mxu0 0
    %483 = vmatpush1.bf16.msra.mxu0 0
    %484 = vmatprep.subr.bf16.mxu0 0
    %485 = vmatpush1.bf16.msra.mxu0 0
    %486 = vmatprep.subr.bf16.mxu0 0
    %487 = vmatpush1.bf16.msra.mxu0 0
    %488 = vmatprep.mubr.bf16.mxu0 0
    %489 = vmatmul.mubr.bf16.gmra.mrb[0].mxu0 %v454
    %v490 = vpop.f32.mrb[0].mxu0
    %v491 = vadd.f32 0.0, %v490
    %v492 = vpop.f32.mrb[0].mxu0
    %v493 = vadd.f32 0.0, %v492
    %v494 = vpop.f32.mrb[0].mxu0
    %v495 = vpop.f32.mrb[0].mxu0
    %496 = vdwg.mxu0
    %v505 = vunpack.c.l.b16 %v293
    %v506 = vunpack.c.h.b16 %v293
    %v507 = vunpack.c.l.b16 %v294
    %v508 = vunpack.c.h.b16 %v294
    %v509 = vunpack.c.l.b16 %v295
    %v510 = vunpack.c.h.b16 %v295
    %v511 = vunpack.c.l.b16 %v296
    %v512 = vunpack.c.h.b16 %v296
    %v513 = vunpack.c.l.b16 %v297
    %v514 = vunpack.c.h.b16 %v297
    %v515 = vunpack.c.l.b16 %v298
    %v516 = vunpack.c.h.b16 %v298
    %v517 = vunpack.c.l.b16 %v299
    %v518 = vunpack.c.h.b16 %v299
    %v519 = vunpack.c.l.b16 %v300
    %v520 = vunpack.c.h.b16 %v300
    %v521 = vpack.c.b16 %v507, %v505
    %v522 = vpack.c.b16 %v508, %v506
    %v523 = vpack.c.b16 %v511, %v509
    %v524 = vpack.c.b16 %v512, %v510
    %v525 = vpack.c.b16 %v515, %v513
    %v526 = vpack.c.b16 %v516, %v514
    %v527 = vpack.c.b16 %v519, %v517
    %v528 = vpack.c.b16 %v520, %v518
    %537 = vmatprep.subr.bf16.mxu0 %v522
    %538 = vmatpush1.bf16.msra.mxu0 %v521
    %539 = vmatprep.subr.bf16.mxu0 %v524
    %540 = vmatpush1.bf16.msra.mxu0 %v523
    %541 = vmatprep.subr.bf16.mxu0 %v526
    %542 = vmatpush1.bf16.msra.mxu0 %v525
    %543 = vmatprep.subr.bf16.mxu0 %v528
    %544 = vmatpush1.bf16.msra.mxu0 %v527
    %545 = vmatprep.subr.bf16.mxu0 0
    %546 = vmatpush1.bf16.msra.mxu0 0
    %547 = vmatprep.subr.bf16.mxu0 0
    %548 = vmatpush1.bf16.msra.mxu0 0
    %549 = vmatprep.subr.bf16.mxu0 0
    %550 = vmatpush1.bf16.msra.mxu0 0
    %551 = vmatprep.subr.bf16.mxu0 0
    %552 = vmatpush1.bf16.msra.mxu0 0
    %553 = vmatprep.subr.bf16.mxu0 0
    %554 = vmatpush1.bf16.msra.mxu0 0
    %555 = vmatprep.subr.bf16.mxu0 0
    %556 = vmatpush1.bf16.msra.mxu0 0
    %557 = vmatprep.subr.bf16.mxu0 0
    %558 = vmatpush1.bf16.msra.mxu0 0
    %559 = vmatprep.subr.bf16.mxu0 0
    %560 = vmatpush1.bf16.msra.mxu0 0
    %561 = vmatprep.subr.bf16.mxu0 0
    %562 = vmatpush1.bf16.msra.mxu0 0
    %563 = vmatprep.subr.bf16.mxu0 0
    %564 = vmatpush1.bf16.msra.mxu0 0
    %565 = vmatprep.subr.bf16.mxu0 0
    %566 = vmatpush1.bf16.msra.mxu0 0
    %567 = vmatprep.subr.bf16.mxu0 0
    %568 = vmatpush1.bf16.msra.mxu0 0
    %569 = vmatprep.mubr.bf16.mxu0 0
    %570 = vmatmul.mubr.bf16.gmra.mrb[0].mxu0 %v344
    %v571 = vpop.f32.mrb[0].mxu0
    %v572 = vadd.f32 %v491, %v571
    %v573 = vpop.f32.mrb[0].mxu0
    %v574 = vadd.f32 %v493, %v573
    %v575 = vpop.f32.mrb[0].mxu0
    %v576 = vpop.f32.mrb[0].mxu0
    %577 = vdwg.mxu0
    %v579 = vlaneseq
    %v580 = vshrl.u32 %v579, 7
    %v581 = vsub.s32 0, %v580
    %v582 = vrot.slane %v301, %v581
    %v583 = vlaneseq
    %v584 = vshrl.u32 %v583, 7
    %v585 = vsub.s32 1, %v584
    %v586 = vrot.slane %v301, %v585
    %v589 = vadd.f32 %v572, %v582
    %v590 = vadd.f32 %v574, %v586
    %v591 = vtanh.pop %v589
    %v592 = vtanh.pop %v590
    %v593 = vmul.f32 %v591, 0.5
    %v594 = vmul.f32 %v592, 0.5
    %v595 = vadd.f32 %v593, 0.5
    %v596 = vadd.f32 %v594, 0.5
    %v597 = vmul.f32 %v595, 0.0
    %599 = vrot.lane.b32.xlu0 %v592, 64
    %v600 = vpop.permute.xlu0 %599
    %v602 = vmul.f32 %v595, %v600
    %604 = vrot.lane.b32.xlu0 %v602, 64
    %v605 = vpop.permute.xlu0 %604
    %v607 = vadd.f32 %v597, %v605
    %v608 = vtanh.pop %v607
    %610 = vrot.lane.b32.xlu0 %v608, 64
    %v611 = vpop.permute.xlu0 %610
    %v613 = vmul.f32 %v596, %v611
    %v614 = vpack.c.bf16 %v613, %v613
    %615 = vmatprep.subr.bf16.mxu0 %v327
    %616 = vmatpush1.bf16.msra.mxu0 %v326
    %617 = vmatprep.subr.bf16.mxu0 %v329
    %618 = vmatpush1.bf16.msra.mxu0 %v328
    %619 = vmatprep.subr.bf16.mxu0 %v331
    %620 = vmatpush1.bf16.msra.mxu0 %v330
    %621 = vmatprep.subr.bf16.mxu0 %v333
    %622 = vmatpush1.bf16.msra.mxu0 %v332
    %623 = vmatprep.subr.bf16.mxu0 0
    %624 = vmatpush1.bf16.msra.mxu0 0
    %625 = vmatprep.subr.bf16.mxu0 0
    %626 = vmatpush1.bf16.msra.mxu0 0
    %627 = vmatprep.subr.bf16.mxu0 0
    %628 = vmatpush1.bf16.msra.mxu0 0
    %629 = vmatprep.subr.bf16.mxu0 0
    %630 = vmatpush1.bf16.msra.mxu0 0
    %631 = vmatprep.subr.bf16.mxu0 0
    %632 = vmatpush1.bf16.msra.mxu0 0
    %633 = vmatprep.subr.bf16.mxu0 0
    %634 = vmatpush1.bf16.msra.mxu0 0
    %635 = vmatprep.subr.bf16.mxu0 0
    %636 = vmatpush1.bf16.msra.mxu0 0
    %637 = vmatprep.subr.bf16.mxu0 0
    %638 = vmatpush1.bf16.msra.mxu0 0
    %639 = vmatprep.subr.bf16.mxu0 0
    %640 = vmatpush1.bf16.msra.mxu0 0
    %641 = vmatprep.subr.bf16.mxu0 0
    %642 = vmatpush1.bf16.msra.mxu0 0
    %643 = vmatprep.subr.bf16.mxu0 0
    %644 = vmatpush1.bf16.msra.mxu0 0
    %645 = vmatprep.subr.bf16.mxu0 0
    %646 = vmatpush1.bf16.msra.mxu0 0
    %647 = vmatprep.mubr.bf16.mxu0 0
    %648 = vmatmul.mubr.bf16.gmra.mrb[0].mxu0 %v454
    %v649 = vpop.f32.mrb[0].mxu0
    %v650 = vadd.f32 0.0, %v649
    %v651 = vpop.f32.mrb[0].mxu0
    %v652 = vadd.f32 0.0, %v651
    %v653 = vpop.f32.mrb[0].mxu0
    %v654 = vpop.f32.mrb[0].mxu0
    %655 = vdwg.mxu0
    %v656 = vadd.f32 %v243, %v650
    %v657 = vadd.f32 %v245, %v652
    %v658 = vtanh.pop %v656
    %v659 = vtanh.pop %v657
    %v660 = vmul.f32 %v658, 0.5
    %v661 = vmul.f32 %v659, 0.5
    %v662 = vadd.f32 %v660, 0.5
    %v663 = vadd.f32 %v661, 0.5
    %v664 = vmul.f32 %v662, %v405
    %666 = vrot.lane.b32.xlu0 %v659, 64
    %v667 = vpop.permute.xlu0 %666
    %v669 = vmul.f32 %v662, %v667
    %671 = vrot.lane.b32.xlu0 %v669, 64
    %v672 = vpop.permute.xlu0 %671
    %v674 = vadd.f32 %v664, %v672
    %v675 = vtanh.pop %v674
    %677 = vrot.lane.b32.xlu0 %v675, 64
    %v678 = vpop.permute.xlu0 %677
    %v680 = vmul.f32 %v663, %v678
    %v681 = vpack.c.bf16 %v680, %v680
    %v683 = vsel %vm342, %v681, 0
    %685 = vmatprep.subr.bf16.mxu0 %v438
    %686 = vmatpush1.bf16.msra.mxu0 %v437
    %687 = vmatprep.subr.bf16.mxu0 %v440
    %688 = vmatpush1.bf16.msra.mxu0 %v439
    %689 = vmatprep.subr.bf16.mxu0 %v442
    %690 = vmatpush1.bf16.msra.mxu0 %v441
    %691 = vmatprep.subr.bf16.mxu0 %v444
    %692 = vmatpush1.bf16.msra.mxu0 %v443
    %693 = vmatprep.subr.bf16.mxu0 0
    %694 = vmatpush1.bf16.msra.mxu0 0
    %695 = vmatprep.subr.bf16.mxu0 0
    %696 = vmatpush1.bf16.msra.mxu0 0
    %697 = vmatprep.subr.bf16.mxu0 0
    %698 = vmatpush1.bf16.msra.mxu0 0
    %699 = vmatprep.subr.bf16.mxu0 0
    %700 = vmatpush1.bf16.msra.mxu0 0
    %701 = vmatprep.subr.bf16.mxu0 0
    %702 = vmatpush1.bf16.msra.mxu0 0
    %703 = vmatprep.subr.bf16.mxu0 0
    %704 = vmatpush1.bf16.msra.mxu0 0
    %705 = vmatprep.subr.bf16.mxu0 0
    %706 = vmatpush1.bf16.msra.mxu0 0
    %707 = vmatprep.subr.bf16.mxu0 0
    %708 = vmatpush1.bf16.msra.mxu0 0
    %709 = vmatprep.subr.bf16.mxu0 0
    %710 = vmatpush1.bf16.msra.mxu0 0
    %711 = vmatprep.subr.bf16.mxu0 0
    %712 = vmatpush1.bf16.msra.mxu0 0
    %713 = vmatprep.subr.bf16.mxu0 0
    %714 = vmatpush1.bf16.msra.mxu0 0
    %715 = vmatprep.subr.bf16.mxu0 0
    %716 = vmatpush1.bf16.msra.mxu0 0
    %717 = vmatprep.mubr.bf16.mxu0 0
    %718 = vmatmul.mubr.bf16.gmra.mrb[0].mxu0 %v683
    %v719 = vpop.f32.mrb[0].mxu0
    %v720 = vadd.f32 0.0, %v719
    %v721 = vpop.f32.mrb[0].mxu0
    %v722 = vadd.f32 0.0, %v721
    %v723 = vpop.f32.mrb[0].mxu0
    %v724 = vpop.f32.mrb[0].mxu0
    %725 = vdwg.mxu0
    %v727 = vsel %vm342, %v614, 0
    %729 = vmatprep.subr.bf16.mxu0 %v522
    %730 = vmatpush1.bf16.msra.mxu0 %v521
    %731 = vmatprep.subr.bf16.mxu0 %v524
    %732 = vmatpush1.bf16.msra.mxu0 %v523
    %733 = vmatprep.subr.bf16.mxu0 %v526
    %734 = vmatpush1.bf16.msra.mxu0 %v525
    %735 = vmatprep.subr.bf16.mxu0 %v528
    %736 = vmatpush1.bf16.msra.mxu0 %v527
    %737 = vmatprep.subr.bf16.mxu0 0
    %738 = vmatpush1.bf16.msra.mxu0 0
    %739 = vmatprep.subr.bf16.mxu0 0
    %740 = vmatpush1.bf16.msra.mxu0 0
    %741 = vmatprep.subr.bf16.mxu0 0
    %742 = vmatpush1.bf16.msra.mxu0 0
    %743 = vmatprep.subr.bf16.mxu0 0
    %744 = vmatpush1.bf16.msra.mxu0 0
    %745 = vmatprep.subr.bf16.mxu0 0
    %746 = vmatpush1.bf16.msra.mxu0 0
    %747 = vmatprep.subr.bf16.mxu0 0
    %748 = vmatpush1.bf16.msra.mxu0 0
    %749 = vmatprep.subr.bf16.mxu0 0
    %750 = vmatpush1.bf16.msra.mxu0 0
    %751 = vmatprep.subr.bf16.mxu0 0
    %752 = vmatpush1.bf16.msra.mxu0 0
    %753 = vmatprep.subr.bf16.mxu0 0
    %754 = vmatpush1.bf16.msra.mxu0 0
    %755 = vmatprep.subr.bf16.mxu0 0
    %756 = vmatpush1.bf16.msra.mxu0 0
    %757 = vmatprep.subr.bf16.mxu0 0
    %758 = vmatpush1.bf16.msra.mxu0 0
    %759 = vmatprep.subr.bf16.mxu0 0
    %760 = vmatpush1.bf16.msra.mxu0 0
    %761 = vmatprep.mubr.bf16.mxu0 0
    %762 = vmatmul.mubr.bf16.gmra.mrb[0].mxu0 %v727
    %v763 = vpop.f32.mrb[0].mxu0
    %v764 = vadd.f32 %v720, %v763
    %v765 = vpop.f32.mrb[0].mxu0
    %v766 = vadd.f32 %v722, %v765
    %v767 = vpop.f32.mrb[0].mxu0
    %v768 = vpop.f32.mrb[0].mxu0
    %769 = vdwg.mxu0
    %v770 = vadd.f32 %v764, %v582
    %v771 = vadd.f32 %v766, %v586
    %v772 = vtanh.pop %v770
    %v773 = vtanh.pop %v771
    %v774 = vmul.f32 %v772, 0.5
    %v775 = vmul.f32 %v773, 0.5
    %v776 = vadd.f32 %v774, 0.5
    %v777 = vadd.f32 %v775, 0.5
    %v778 = vmul.f32 %v776, %v607
    %780 = vrot.lane.b32.xlu0 %v773, 64
    %v781 = vpop.permute.xlu0 %780
    %v783 = vmul.f32 %v776, %v781
    %785 = vrot.lane.b32.xlu0 %v783, 64
    %v786 = vpop.permute.xlu0 %785
    %v788 = vadd.f32 %v778, %v786
    %v789 = vtanh.pop %v788
    %791 = vrot.lane.b32.xlu0 %v789, 64
    %v792 = vpop.permute.xlu0 %791
    %v794 = vmul.f32 %v777, %v792
    %v795 = vpack.c.bf16 %v794, %v794
    %796 = vmatprep.subr.bf16.mxu0 %v327
    %797 = vmatpush1.bf16.msra.mxu0 %v326
    %798 = vmatprep.subr.bf16.mxu0 %v329
    %799 = vmatpush1.bf16.msra.mxu0 %v328
    %800 = vmatprep.subr.bf16.mxu0 %v331
    %801 = vmatpush1.bf16.msra.mxu0 %v330
    %802 = vmatprep.subr.bf16.mxu0 %v333
    %803 = vmatpush1.bf16.msra.mxu0 %v332
    %804 = vmatprep.subr.bf16.mxu0 0
    %805 = vmatpush1.bf16.msra.mxu0 0
    %806 = vmatprep.subr.bf16.mxu0 0
    %807 = vmatpush1.bf16.msra.mxu0 0
    %808 = vmatprep.subr.bf16.mxu0 0
    %809 = vmatpush1.bf16.msra.mxu0 0
    %810 = vmatprep.subr.bf16.mxu0 0
    %811 = vmatpush1.bf16.msra.mxu0 0
    %812 = vmatprep.subr.bf16.mxu0 0
    %813 = vmatpush1.bf16.msra.mxu0 0
    %814 = vmatprep.subr.bf16.mxu0 0
    %815 = vmatpush1.bf16.msra.mxu0 0
    %816 = vmatprep.subr.bf16.mxu0 0
    %817 = vmatpush1.bf16.msra.mxu0 0
    %818 = vmatprep.subr.bf16.mxu0 0
    %819 = vmatpush1.bf16.msra.mxu0 0
    %820 = vmatprep.subr.bf16.mxu0 0
    %821 = vmatpush1.bf16.msra.mxu0 0
    %822 = vmatprep.subr.bf16.mxu0 0
    %823 = vmatpush1.bf16.msra.mxu0 0
    %824 = vmatprep.subr.bf16.mxu0 0
    %825 = vmatpush1.bf16.msra.mxu0 0
    %826 = vmatprep.subr.bf16.mxu0 0
    %827 = vmatpush1.bf16.msra.mxu0 0
    %828 = vmatprep.mubr.bf16.mxu0 0
    %829 = vmatmul.mubr.bf16.gmra.mrb[0].mxu0 %v683
    %v830 = vpop.f32.mrb[0].mxu0
    %v831 = vadd.f32 0.0, %v830
    %v832 = vpop.f32.mrb[0].mxu0
    %v833 = vadd.f32 0.0, %v832
    %v834 = vpop.f32.mrb[0].mxu0
    %v835 = vpop.f32.mrb[0].mxu0
    %836 = vdwg.mxu0
    %v837 = vadd.f32 %v249, %v831
    %v838 = vadd.f32 %v251, %v833
    %v839 = vtanh.pop %v837
    %v840 = vtanh.pop %v838
    %v841 = vmul.f32 %v839, 0.5
    %v842 = vmul.f32 %v840, 0.5
    %v843 = vadd.f32 %v841, 0.5
    %v844 = vadd.f32 %v842, 0.5
    %v845 = vmul.f32 %v843, %v674
    %847 = vrot.lane.b32.xlu0 %v840, 64
    %v848 = vpop.permute.xlu0 %847
    %v850 = vmul.f32 %v843, %v848
    %852 = vrot.lane.b32.xlu0 %v850, 64
    %v853 = vpop.permute.xlu0 %852
    %v855 = vadd.f32 %v845, %v853
    %v856 = vtanh.pop %v855
    %858 = vrot.lane.b32.xlu0 %v856, 64
    %v859 = vpop.permute.xlu0 %858
    %v861 = vmul.f32 %v844, %v859
    %v862 = vpack.c.bf16 %v861, %v861
    %v864 = vsel %vm342, %v862, 0
    %866 = vmatprep.subr.bf16.mxu0 %v438
    %867 = vmatpush1.bf16.msra.mxu0 %v437
    %868 = vmatprep.subr.bf16.mxu0 %v440
    %869 = vmatpush1.bf16.msra.mxu0 %v439
    %870 = vmatprep.subr.bf16.mxu0 %v442
    %871 = vmatpush1.bf16.msra.mxu0 %v441
    %872 = vmatprep.subr.bf16.mxu0 %v444
    %873 = vmatpush1.bf16.msra.mxu0 %v443
    %874 = vmatprep.subr.bf16.mxu0 0
    %875 = vmatpush1.bf16.msra.mxu0 0
    %876 = vmatprep.subr.bf16.mxu0 0
    %877 = vmatpush1.bf16.msra.mxu0 0
    %878 = vmatprep.subr.bf16.mxu0 0
    %879 = vmatpush1.bf16.msra.mxu0 0
    %880 = vmatprep.subr.bf16.mxu0 0
    %881 = vmatpush1.bf16.msra.mxu0 0
    %882 = vmatprep.subr.bf16.mxu0 0
    %883 = vmatpush1.bf16.msra.mxu0 0
    %884 = vmatprep.subr.bf16.mxu0 0
    %885 = vmatpush1.bf16.msra.mxu0 0
    %886 = vmatprep.subr.bf16.mxu0 0
    %887 = vmatpush1.bf16.msra.mxu0 0
    %888 = vmatprep.subr.bf16.mxu0 0
    %889 = vmatpush1.bf16.msra.mxu0 0
    %890 = vmatprep.subr.bf16.mxu0 0
    %891 = vmatpush1.bf16.msra.mxu0 0
    %892 = vmatprep.subr.bf16.mxu0 0
    %893 = vmatpush1.bf16.msra.mxu0 0
    %894 = vmatprep.subr.bf16.mxu0 0
    %895 = vmatpush1.bf16.msra.mxu0 0
    %896 = vmatprep.subr.bf16.mxu0 0
    %897 = vmatpush1.bf16.msra.mxu0 0
    %898 = vmatprep.mubr.bf16.mxu0 0
    %899 = vmatmul.mubr.bf16.gmra.mrb[0].mxu0 %v864
    %v900 = vpop.f32.mrb[0].mxu0
    %v901 = vadd.f32 0.0, %v900
    %v902 = vpop.f32.mrb[0].mxu0
    %v903 = vadd.f32 0.0, %v902
    %v904 = vpop.f32.mrb[0].mxu0
    %v905 = vpop.f32.mrb[0].mxu0
    %906 = vdwg.mxu0
    %v908 = vsel %vm342, %v795, 0
    %910 = vmatprep.subr.bf16.mxu0 %v522
    %911 = vmatpush1.bf16.msra.mxu0 %v521
    %912 = vmatprep.subr.bf16.mxu0 %v524
    %913 = vmatpush1.bf16.msra.mxu0 %v523
    %914 = vmatprep.subr.bf16.mxu0 %v526
    %915 = vmatpush1.bf16.msra.mxu0 %v525
    %916 = vmatprep.subr.bf16.mxu0 %v528
    %917 = vmatpush1.bf16.msra.mxu0 %v527
    %918 = vmatprep.subr.bf16.mxu0 0
    %919 = vmatpush1.bf16.msra.mxu0 0
    %920 = vmatprep.subr.bf16.mxu0 0
    %921 = vmatpush1.bf16.msra.mxu0 0
    %922 = vmatprep.subr.bf16.mxu0 0
    %923 = vmatpush1.bf16.msra.mxu0 0
    %924 = vmatprep.subr.bf16.mxu0 0
    %925 = vmatpush1.bf16.msra.mxu0 0
    %926 = vmatprep.subr.bf16.mxu0 0
    %927 = vmatpush1.bf16.msra.mxu0 0
    %928 = vmatprep.subr.bf16.mxu0 0
    %929 = vmatpush1.bf16.msra.mxu0 0
    %930 = vmatprep.subr.bf16.mxu0 0
    %931 = vmatpush1.bf16.msra.mxu0 0
    %932 = vmatprep.subr.bf16.mxu0 0
    %933 = vmatpush1.bf16.msra.mxu0 0
    %934 = vmatprep.subr.bf16.mxu0 0
    %935 = vmatpush1.bf16.msra.mxu0 0
    %936 = vmatprep.subr.bf16.mxu0 0
    %937 = vmatpush1.bf16.msra.mxu0 0
    %938 = vmatprep.subr.bf16.mxu0 0
    %939 = vmatpush1.bf16.msra.mxu0 0
    %940 = vmatprep.subr.bf16.mxu0 0
    %941 = vmatpush1.bf16.msra.mxu0 0
    %942 = vmatprep.mubr.bf16.mxu0 0
    %943 = vmatmul.mubr.bf16.gmra.mrb[0].mxu0 %v908
    %v944 = vpop.f32.mrb[0].mxu0
    %v945 = vadd.f32 %v901, %v944
    %v946 = vpop.f32.mrb[0].mxu0
    %v947 = vadd.f32 %v903, %v946
    %v948 = vpop.f32.mrb[0].mxu0
    %v949 = vpop.f32.mrb[0].mxu0
    %950 = vdwg.mxu0
    %v951 = vadd.f32 %v945, %v582
    %v952 = vadd.f32 %v947, %v586
    %v953 = vtanh.pop %v951
    %v954 = vtanh.pop %v952
    %v955 = vmul.f32 %v953, 0.5
    %v956 = vmul.f32 %v954, 0.5
    %v957 = vadd.f32 %v955, 0.5
    %v958 = vadd.f32 %v956, 0.5
    %v959 = vmul.f32 %v957, %v788
    %961 = vrot.lane.b32.xlu0 %v954, 64
    %v962 = vpop.permute.xlu0 %961
    %v964 = vmul.f32 %v957, %v962
    %966 = vrot.lane.b32.xlu0 %v964, 64
    %v967 = vpop.permute.xlu0 %966
    %v969 = vadd.f32 %v959, %v967
    %v970 = vtanh.pop %v969
    %972 = vrot.lane.b32.xlu0 %v970, 64
    %v973 = vpop.permute.xlu0 %972
    %v975 = vmul.f32 %v958, %v973
    %v976 = vpack.c.bf16 %v975, %v975
    %977 = vmatprep.subr.bf16.mxu0 %v327
    %978 = vmatpush1.bf16.msra.mxu0 %v326
    %979 = vmatprep.subr.bf16.mxu0 %v329
    %980 = vmatpush1.bf16.msra.mxu0 %v328
    %981 = vmatprep.subr.bf16.mxu0 %v331
    %982 = vmatpush1.bf16.msra.mxu0 %v330
    %983 = vmatprep.subr.bf16.mxu0 %v333
    %984 = vmatpush1.bf16.msra.mxu0 %v332
    %985 = vmatprep.subr.bf16.mxu0 0
    %986 = vmatpush1.bf16.msra.mxu0 0
    %987 = vmatprep.subr.bf16.mxu0 0
    %988 = vmatpush1.bf16.msra.mxu0 0
    %989 = vmatprep.subr.bf16.mxu0 0
    %990 = vmatpush1.bf16.msra.mxu0 0
    %991 = vmatprep.subr.bf16.mxu0 0
    %992 = vmatpush1.bf16.msra.mxu0 0
    %993 = vmatprep.subr.bf16.mxu0 0
    %994 = vmatpush1.bf16.msra.mxu0 0
    %995 = vmatprep.subr.bf16.mxu0 0
    %996 = vmatpush1.bf16.msra.mxu0 0
    %997 = vmatprep.subr.bf16.mxu0 0
    %998 = vmatpush1.bf16.msra.mxu0 0
    %999 = vmatprep.subr.bf16.mxu0 0
    %1000 = vmatpush1.bf16.msra.mxu0 0
    %1001 = vmatprep.subr.bf16.mxu0 0
    %1002 = vmatpush1.bf16.msra.mxu0 0
    %1003 = vmatprep.subr.bf16.mxu0 0
    %1004 = vmatpush1.bf16.msra.mxu0 0
    %1005 = vmatprep.subr.bf16.mxu0 0
    %1006 = vmatpush1.bf16.msra.mxu0 0
    %1007 = vmatprep.subr.bf16.mxu0 0
    %1008 = vmatpush1.bf16.msra.mxu0 0
    %1009 = vmatprep.mubr.bf16.mxu0 0
    %1010 = vmatmul.mubr.bf16.gmra.mrb[0].mxu0 %v864
    %v1011 = vpop.f32.mrb[0].mxu0
    %v1012 = vadd.f32 0.0, %v1011
    %v1013 = vpop.f32.mrb[0].mxu0
    %v1014 = vadd.f32 0.0, %v1013
    %v1015 = vpop.f32.mrb[0].mxu0
    %v1016 = vpop.f32.mrb[0].mxu0
    %1017 = vdwg.mxu0
    %v1018 = vadd.f32 %v253, %v1012
    %v1019 = vadd.f32 %v255, %v1014
    %v1020 = vtanh.pop %v1018
    %v1021 = vtanh.pop %v1019
    %v1022 = vmul.f32 %v1020, 0.5
    %v1023 = vmul.f32 %v1021, 0.5
    %v1024 = vadd.f32 %v1022, 0.5
    %v1025 = vadd.f32 %v1023, 0.5
    %v1026 = vmul.f32 %v1024, %v855
    %1028 = vrot.lane.b32.xlu0 %v1021, 64
    %v1029 = vpop.permute.xlu0 %1028
    %v1031 = vmul.f32 %v1024, %v1029
    %1033 = vrot.lane.b32.xlu0 %v1031, 64
    %v1034 = vpop.permute.xlu0 %1033
    %v1036 = vadd.f32 %v1026, %v1034
    %v1037 = vtanh.pop %v1036
    %1039 = vrot.lane.b32.xlu0 %v1037, 64
    %v1040 = vpop.permute.xlu0 %1039
    %v1042 = vmul.f32 %v1025, %v1040
    %v1043 = vpack.c.bf16 %v1042, %v1042
    %v1045 = vsel %vm342, %v1043, 0
    %1047 = vmatprep.subr.bf16.mxu0 %v438
    %1048 = vmatpush1.bf16.msra.mxu0 %v437
    %1049 = vmatprep.subr.bf16.mxu0 %v440
    %1050 = vmatpush1.bf16.msra.mxu0 %v439
    %1051 = vmatprep.subr.bf16.mxu0 %v442
    %1052 = vmatpush1.bf16.msra.mxu0 %v441
    %1053 = vmatprep.subr.bf16.mxu0 %v444
    %1054 = vmatpush1.bf16.msra.mxu0 %v443
    %1055 = vmatprep.subr.bf16.mxu0 0
    %1056 = vmatpush1.bf16.msra.mxu0 0
    %1057 = vmatprep.subr.bf16.mxu0 0
    %1058 = vmatpush1.bf16.msra.mxu0 0
    %1059 = vmatprep.subr.bf16.mxu0 0
    %1060 = vmatpush1.bf16.msra.mxu0 0
    %1061 = vmatprep.subr.bf16.mxu0 0
    %1062 = vmatpush1.bf16.msra.mxu0 0
    %1063 = vmatprep.subr.bf16.mxu0 0
    %1064 = vmatpush1.bf16.msra.mxu0 0
    %1065 = vmatprep.subr.bf16.mxu0 0
    %1066 = vmatpush1.bf16.msra.mxu0 0
    %1067 = vmatprep.subr.bf16.mxu0 0
    %1068 = vmatpush1.bf16.msra.mxu0 0
    %1069 = vmatprep.subr.bf16.mxu0 0
    %1070 = vmatpush1.bf16.msra.mxu0 0
    %1071 = vmatprep.subr.bf16.mxu0 0
    %1072 = vmatpush1.bf16.msra.mxu0 0
    %1073 = vmatprep.subr.bf16.mxu0 0
    %1074 = vmatpush1.bf16.msra.mxu0 0
    %1075 = vmatprep.subr.bf16.mxu0 0
    %1076 = vmatpush1.bf16.msra.mxu0 0
    %1077 = vmatprep.subr.bf16.mxu0 0
    %1078 = vmatpush1.bf16.msra.mxu0 0
    %1079 = vmatprep.mubr.bf16.mxu0 0
    %1080 = vmatmul.mubr.bf16.gmra.mrb[0].mxu0 %v1045
    %v1081 = vpop.f32.mrb[0].mxu0
    %v1082 = vadd.f32 0.0, %v1081
    %v1083 = vpop.f32.mrb[0].mxu0
    %v1084 = vadd.f32 0.0, %v1083
    %v1085 = vpop.f32.mrb[0].mxu0
    %v1086 = vpop.f32.mrb[0].mxu0
    %1087 = vdwg.mxu0
    %v1089 = vsel %vm342, %v976, 0
    %1091 = vmatprep.subr.bf16.mxu0 %v522
    %1092 = vmatpush1.bf16.msra.mxu0 %v521
    %1093 = vmatprep.subr.bf16.mxu0 %v524
    %1094 = vmatpush1.bf16.msra.mxu0 %v523
    %1095 = vmatprep.subr.bf16.mxu0 %v526
    %1096 = vmatpush1.bf16.msra.mxu0 %v525
    %1097 = vmatprep.subr.bf16.mxu0 %v528
    %1098 = vmatpush1.bf16.msra.mxu0 %v527
    %1099 = vmatprep.subr.bf16.mxu0 0
    %1100 = vmatpush1.bf16.msra.mxu0 0
    %1101 = vmatprep.subr.bf16.mxu0 0
    %1102 = vmatpush1.bf16.msra.mxu0 0
    %1103 = vmatprep.subr.bf16.mxu0 0
    %1104 = vmatpush1.bf16.msra.mxu0 0
    %1105 = vmatprep.subr.bf16.mxu0 0
    %1106 = vmatpush1.bf16.msra.mxu0 0
    %1107 = vmatprep.subr.bf16.mxu0 0
    %1108 = vmatpush1.bf16.msra.mxu0 0
    %1109 = vmatprep.subr.bf16.mxu0 0
    %1110 = vmatpush1.bf16.msra.mxu0 0
    %1111 = vmatprep.subr.bf16.mxu0 0
    %1112 = vmatpush1.bf16.msra.mxu0 0
    %1113 = vmatprep.subr.bf16.mxu0 0
    %1114 = vmatpush1.bf16.msra.mxu0 0
    %1115 = vmatprep.subr.bf16.mxu0 0
    %1116 = vmatpush1.bf16.msra.mxu0 0
    %1117 = vmatprep.subr.bf16.mxu0 0
    %1118 = vmatpush1.bf16.msra.mxu0 0
    %1119 = vmatprep.subr.bf16.mxu0 0
    %1120 = vmatpush1.bf16.msra.mxu0 0
    %1121 = vmatprep.subr.bf16.mxu0 0
    %1122 = vmatpush1.bf16.msra.mxu0 0
    %1123 = vmatprep.mubr.bf16.mxu0 0
    %1124 = vmatmul.mubr.bf16.gmra.mrb[0].mxu0 %v1089
    %v1125 = vpop.f32.mrb[0].mxu0
    %v1126 = vadd.f32 %v1082, %v1125
    %v1127 = vpop.f32.mrb[0].mxu0
    %v1128 = vadd.f32 %v1084, %v1127
    %v1129 = vpop.f32.mrb[0].mxu0
    %v1130 = vpop.f32.mrb[0].mxu0
    %1131 = vdwg.mxu0
    %v1132 = vadd.f32 %v1126, %v582
    %v1133 = vadd.f32 %v1128, %v586
    %v1134 = vtanh.pop %v1132
    %v1135 = vtanh.pop %v1133
    %v1136 = vmul.f32 %v1134, 0.5
    %v1137 = vmul.f32 %v1135, 0.5
    %v1138 = vadd.f32 %v1136, 0.5
    %v1139 = vadd.f32 %v1137, 0.5
    %v1140 = vmul.f32 %v1138, %v969
    %1142 = vrot.lane.b32.xlu0 %v1135, 64
    %v1143 = vpop.permute.xlu0 %1142
    %v1145 = vmul.f32 %v1138, %v1143
    %1147 = vrot.lane.b32.xlu0 %v1145, 64
    %v1148 = vpop.permute.xlu0 %1147
    %v1150 = vadd.f32 %v1140, %v1148
    %v1151 = vtanh.pop %v1150
    %1153 = vrot.lane.b32.xlu0 %v1151, 64
    %v1154 = vpop.permute.xlu0 %1153
    %v1156 = vmul.f32 %v1139, %v1154
    %v1157 = vpack.c.bf16 %v1156, %v1156
    %1158 = vmatprep.subr.bf16.mxu0 %v327
    %1159 = vmatpush1.bf16.msra.mxu0 %v326
    %1160 = vmatprep.subr.bf16.mxu0 %v329
    %1161 = vmatpush1.bf16.msra.mxu0 %v328
    %1162 = vmatprep.subr.bf16.mxu0 %v331
    %1163 = vmatpush1.bf16.msra.mxu0 %v330
    %1164 = vmatprep.subr.bf16.mxu0 %v333
    %1165 = vmatpush1.bf16.msra.mxu0 %v332
    %1166 = vmatprep.subr.bf16.mxu0 0
    %1167 = vmatpush1.bf16.msra.mxu0 0
    %1168 = vmatprep.subr.bf16.mxu0 0
    %1169 = vmatpush1.bf16.msra.mxu0 0
    %1170 = vmatprep.subr.bf16.mxu0 0
    %1171 = vmatpush1.bf16.msra.mxu0 0
    %1172 = vmatprep.subr.bf16.mxu0 0
    %1173 = vmatpush1.bf16.msra.mxu0 0
    %1174 = vmatprep.subr.bf16.mxu0 0
    %1175 = vmatpush1.bf16.msra.mxu0 0
    %1176 = vmatprep.subr.bf16.mxu0 0
    %1177 = vmatpush1.bf16.msra.mxu0 0
    %1178 = vmatprep.subr.bf16.mxu0 0
    %1179 = vmatpush1.bf16.msra.mxu0 0
    %1180 = vmatprep.subr.bf16.mxu0 0
    %1181 = vmatpush1.bf16.msra.mxu0 0
    %1182 = vmatprep.subr.bf16.mxu0 0
    %1183 = vmatpush1.bf16.msra.mxu0 0
    %1184 = vmatprep.subr.bf16.mxu0 0
    %1185 = vmatpush1.bf16.msra.mxu0 0
    %1186 = vmatprep.subr.bf16.mxu0 0
    %1187 = vmatpush1.bf16.msra.mxu0 0
    %1188 = vmatprep.subr.bf16.mxu0 0
    %1189 = vmatpush1.bf16.msra.mxu0 0
    %1190 = vmatprep.mubr.bf16.mxu0 0
    %1191 = vmatmul.mubr.bf16.gmra.mrb[0].mxu0 %v1045
    %v1192 = vpop.f32.mrb[0].mxu0
    %v1193 = vadd.f32 0.0, %v1192
    %v1194 = vpop.f32.mrb[0].mxu0
    %v1195 = vadd.f32 0.0, %v1194
    %v1196 = vpop.f32.mrb[0].mxu0
    %v1197 = vpop.f32.mrb[0].mxu0
    %1198 = vdwg.mxu0
    %v1199 = vadd.f32 %v259, %v1193
    %v1200 = vadd.f32 %v261, %v1195
    %v1201 = vtanh.pop %v1199
    %v1202 = vtanh.pop %v1200
    %v1203 = vmul.f32 %v1201, 0.5
    %v1204 = vmul.f32 %v1202, 0.5
    %v1205 = vadd.f32 %v1203, 0.5
    %v1206 = vadd.f32 %v1204, 0.5
    %v1207 = vmul.f32 %v1205, %v1036
    %1209 = vrot.lane.b32.xlu0 %v1202, 64
    %v1210 = vpop.permute.xlu0 %1209
    %v1212 = vmul.f32 %v1205, %v1210
    %1214 = vrot.lane.b32.xlu0 %v1212, 64
    %v1215 = vpop.permute.xlu0 %1214
    %v1217 = vadd.f32 %v1207, %v1215
    %v1218 = vtanh.pop %v1217
    %1220 = vrot.lane.b32.xlu0 %v1218, 64
    %v1221 = vpop.permute.xlu0 %1220
    %v1223 = vmul.f32 %v1206, %v1221
    %v1224 = vpack.c.bf16 %v1223, %v1223
    %v1226 = vsel %vm342, %v1224, 0
    %1228 = vmatprep.subr.bf16.mxu0 %v438
    %1229 = vmatpush1.bf16.msra.mxu0 %v437
    %1230 = vmatprep.subr.bf16.mxu0 %v440
    %1231 = vmatpush1.bf16.msra.mxu0 %v439
    %1232 = vmatprep.subr.bf16.mxu0 %v442
    %1233 = vmatpush1.bf16.msra.mxu0 %v441
    %1234 = vmatprep.subr.bf16.mxu0 %v444
    %1235 = vmatpush1.bf16.msra.mxu0 %v443
    %1236 = vmatprep.subr.bf16.mxu0 0
    %1237 = vmatpush1.bf16.msra.mxu0 0
    %1238 = vmatprep.subr.bf16.mxu0 0
    %1239 = vmatpush1.bf16.msra.mxu0 0
    %1240 = vmatprep.subr.bf16.mxu0 0
    %1241 = vmatpush1.bf16.msra.mxu0 0
    %1242 = vmatprep.subr.bf16.mxu0 0
    %1243 = vmatpush1.bf16.msra.mxu0 0
    %1244 = vmatprep.subr.bf16.mxu0 0
    %1245 = vmatpush1.bf16.msra.mxu0 0
    %1246 = vmatprep.subr.bf16.mxu0 0
    %1247 = vmatpush1.bf16.msra.mxu0 0
    %1248 = vmatprep.subr.bf16.mxu0 0
    %1249 = vmatpush1.bf16.msra.mxu0 0
    %1250 = vmatprep.subr.bf16.mxu0 0
    %1251 = vmatpush1.bf16.msra.mxu0 0
    %1252 = vmatprep.subr.bf16.mxu0 0
    %1253 = vmatpush1.bf16.msra.mxu0 0
    %1254 = vmatprep.subr.bf16.mxu0 0
    %1255 = vmatpush1.bf16.msra.mxu0 0
    %1256 = vmatprep.subr.bf16.mxu0 0
    %1257 = vmatpush1.bf16.msra.mxu0 0
    %1258 = vmatprep.subr.bf16.mxu0 0
    %1259 = vmatpush1.bf16.msra.mxu0 0
    %1260 = vmatprep.mubr.bf16.mxu0 0
    %1261 = vmatmul.mubr.bf16.gmra.mrb[0].mxu0 %v1226
    %v1262 = vpop.f32.mrb[0].mxu0
    %v1263 = vadd.f32 0.0, %v1262
    %v1264 = vpop.f32.mrb[0].mxu0
    %v1265 = vadd.f32 0.0, %v1264
    %v1266 = vpop.f32.mrb[0].mxu0
    %v1267 = vpop.f32.mrb[0].mxu0
    %1268 = vdwg.mxu0
    %v1270 = vsel %vm342, %v1157, 0
    %1272 = vmatprep.subr.bf16.mxu0 %v522
    %1273 = vmatpush1.bf16.msra.mxu0 %v521
    %1274 = vmatprep.subr.bf16.mxu0 %v524
    %1275 = vmatpush1.bf16.msra.mxu0 %v523
    %1276 = vmatprep.subr.bf16.mxu0 %v526
    %1277 = vmatpush1.bf16.msra.mxu0 %v525
    %1278 = vmatprep.subr.bf16.mxu0 %v528
    %1279 = vmatpush1.bf16.msra.mxu0 %v527
    %1280 = vmatprep.subr.bf16.mxu0 0
    %1281 = vmatpush1.bf16.msra.mxu0 0
    %1282 = vmatprep.subr.bf16.mxu0 0
    %1283 = vmatpush1.bf16.msra.mxu0 0
    %1284 = vmatprep.subr.bf16.mxu0 0
    %1285 = vmatpush1.bf16.msra.mxu0 0
    %1286 = vmatprep.subr.bf16.mxu0 0
    %1287 = vmatpush1.bf16.msra.mxu0 0
    %1288 = vmatprep.subr.bf16.mxu0 0
    %1289 = vmatpush1.bf16.msra.mxu0 0
    %1290 = vmatprep.subr.bf16.mxu0 0
    %1291 = vmatpush1.bf16.msra.mxu0 0
    %1292 = vmatprep.subr.bf16.mxu0 0
    %1293 = vmatpush1.bf16.msra.mxu0 0
    %1294 = vmatprep.subr.bf16.mxu0 0
    %1295 = vmatpush1.bf16.msra.mxu0 0
    %1296 = vmatprep.subr.bf16.mxu0 0
    %1297 = vmatpush1.bf16.msra.mxu0 0
    %1298 = vmatprep.subr.bf16.mxu0 0
    %1299 = vmatpush1.bf16.msra.mxu0 0
    %1300 = vmatprep.subr.bf16.mxu0 0
    %1301 = vmatpush1.bf16.msra.mxu0 0
    %1302 = vmatprep.subr.bf16.mxu0 0
    %1303 = vmatpush1.bf16.msra.mxu0 0
    %1304 = vmatprep.mubr.bf16.mxu0 0
    %1305 = vmatmul.mubr.bf16.gmra.mrb[0].mxu0 %v1270
    %v1306 = vpop.f32.mrb[0].mxu0
    %v1307 = vadd.f32 %v1263, %v1306
    %v1308 = vpop.f32.mrb[0].mxu0
    %v1309 = vadd.f32 %v1265, %v1308
    %v1310 = vpop.f32.mrb[0].mxu0
    %v1311 = vpop.f32.mrb[0].mxu0
    %1312 = vdwg.mxu0
    %v1313 = vadd.f32 %v1307, %v582
    %v1314 = vadd.f32 %v1309, %v586
    %v1315 = vtanh.pop %v1313
    %v1316 = vtanh.pop %v1314
    %v1317 = vmul.f32 %v1315, 0.5
    %v1318 = vmul.f32 %v1316, 0.5
    %v1319 = vadd.f32 %v1317, 0.5
    %v1320 = vadd.f32 %v1318, 0.5
    %v1321 = vmul.f32 %v1319, %v1150
    %1323 = vrot.lane.b32.xlu0 %v1316, 64
    %v1324 = vpop.permute.xlu0 %1323
    %v1326 = vmul.f32 %v1319, %v1324
    %1328 = vrot.lane.b32.xlu0 %v1326, 64
    %v1329 = vpop.permute.xlu0 %1328
    %v1331 = vadd.f32 %v1321, %v1329
    %v1332 = vtanh.pop %v1331
    %1334 = vrot.lane.b32.xlu0 %v1332, 64
    %v1335 = vpop.permute.xlu0 %1334
    %v1337 = vmul.f32 %v1320, %v1335
    %v1338 = vpack.c.bf16 %v1337, %v1337
    %1339 = vmatprep.subr.bf16.mxu0 %v327
    %1340 = vmatpush1.bf16.msra.mxu0 %v326
    %1341 = vmatprep.subr.bf16.mxu0 %v329
    %1342 = vmatpush1.bf16.msra.mxu0 %v328
    %1343 = vmatprep.subr.bf16.mxu0 %v331
    %1344 = vmatpush1.bf16.msra.mxu0 %v330
    %1345 = vmatprep.subr.bf16.mxu0 %v333
    %1346 = vmatpush1.bf16.msra.mxu0 %v332
    %1347 = vmatprep.subr.bf16.mxu0 0
    %1348 = vmatpush1.bf16.msra.mxu0 0
    %1349 = vmatprep.subr.bf16.mxu0 0
    %1350 = vmatpush1.bf16.msra.mxu0 0
    %1351 = vmatprep.subr.bf16.mxu0 0
    %1352 = vmatpush1.bf16.msra.mxu0 0
    %1353 = vmatprep.subr.bf16.mxu0 0
    %1354 = vmatpush1.bf16.msra.mxu0 0
    %1355 = vmatprep.subr.bf16.mxu0 0
    %1356 = vmatpush1.bf16.msra.mxu0 0
    %1357 = vmatprep.subr.bf16.mxu0 0
    %1358 = vmatpush1.bf16.msra.mxu0 0
    %1359 = vmatprep.subr.bf16.mxu0 0
    %1360 = vmatpush1.bf16.msra.mxu0 0
    %1361 = vmatprep.subr.bf16.mxu0 0
    %1362 = vmatpush1.bf16.msra.mxu0 0
    %1363 = vmatprep.subr.bf16.mxu0 0
    %1364 = vmatpush1.bf16.msra.mxu0 0
    %1365 = vmatprep.subr.bf16.mxu0 0
    %1366 = vmatpush1.bf16.msra.mxu0 0
    %1367 = vmatprep.subr.bf16.mxu0 0
    %1368 = vmatpush1.bf16.msra.mxu0 0
    %1369 = vmatprep.subr.bf16.mxu0 0
    %1370 = vmatpush1.bf16.msra.mxu0 0
    %1371 = vmatprep.mubr.bf16.mxu0 0
    %1372 = vmatmul.mubr.bf16.gmra.mrb[0].mxu0 %v1226
    %v1373 = vpop.f32.mrb[0].mxu0
    %v1374 = vadd.f32 0.0, %v1373
    %v1375 = vpop.f32.mrb[0].mxu0
    %v1376 = vadd.f32 0.0, %v1375
    %v1377 = vpop.f32.mrb[0].mxu0
    %v1378 = vpop.f32.mrb[0].mxu0
    %1379 = vdwg.mxu0
    %v1380 = vadd.f32 %v263, %v1374
    %v1381 = vadd.f32 %v265, %v1376
    %v1382 = vtanh.pop %v1380
    %v1383 = vtanh.pop %v1381
    %v1384 = vmul.f32 %v1382, 0.5
    %v1385 = vmul.f32 %v1383, 0.5
    %v1386 = vadd.f32 %v1384, 0.5
    %v1387 = vadd.f32 %v1385, 0.5
    %v1388 = vmul.f32 %v1386, %v1217
    %1390 = vrot.lane.b32.xlu0 %v1383, 64
    %v1391 = vpop.permute.xlu0 %1390
    %v1393 = vmul.f32 %v1386, %v1391
    %1395 = vrot.lane.b32.xlu0 %v1393, 64
    %v1396 = vpop.permute.xlu0 %1395
    %v1398 = vadd.f32 %v1388, %v1396
    %v1399 = vtanh.pop %v1398
    %1401 = vrot.lane.b32.xlu0 %v1399, 64
    %v1402 = vpop.permute.xlu0 %1401
    %v1404 = vmul.f32 %v1387, %v1402
    %v1405 = vpack.c.bf16 %v1404, %v1404
    %v1407 = vsel %vm342, %v1405, 0
    %1409 = vmatprep.subr.bf16.mxu0 %v438
    %1410 = vmatpush1.bf16.msra.mxu0 %v437
    %1411 = vmatprep.subr.bf16.mxu0 %v440
    %1412 = vmatpush1.bf16.msra.mxu0 %v439
    %1413 = vmatprep.subr.bf16.mxu0 %v442
    %1414 = vmatpush1.bf16.msra.mxu0 %v441
    %1415 = vmatprep.subr.bf16.mxu0 %v444
    %1416 = vmatpush1.bf16.msra.mxu0 %v443
    %1417 = vmatprep.subr.bf16.mxu0 0
    %1418 = vmatpush1.bf16.msra.mxu0 0
    %1419 = vmatprep.subr.bf16.mxu0 0
    %1420 = vmatpush1.bf16.msra.mxu0 0
    %1421 = vmatprep.subr.bf16.mxu0 0
    %1422 = vmatpush1.bf16.msra.mxu0 0
    %1423 = vmatprep.subr.bf16.mxu0 0
    %1424 = vmatpush1.bf16.msra.mxu0 0
    %1425 = vmatprep.subr.bf16.mxu0 0
    %1426 = vmatpush1.bf16.msra.mxu0 0
    %1427 = vmatprep.subr.bf16.mxu0 0
    %1428 = vmatpush1.bf16.msra.mxu0 0
    %1429 = vmatprep.subr.bf16.mxu0 0
    %1430 = vmatpush1.bf16.msra.mxu0 0
    %1431 = vmatprep.subr.bf16.mxu0 0
    %1432 = vmatpush1.bf16.msra.mxu0 0
    %1433 = vmatprep.subr.bf16.mxu0 0
    %1434 = vmatpush1.bf16.msra.mxu0 0
    %1435 = vmatprep.subr.bf16.mxu0 0
    %1436 = vmatpush1.bf16.msra.mxu0 0
    %1437 = vmatprep.subr.bf16.mxu0 0
    %1438 = vmatpush1.bf16.msra.mxu0 0
    %1439 = vmatprep.subr.bf16.mxu0 0
    %1440 = vmatpush1.bf16.msra.mxu0 0
    %1441 = vmatprep.mubr.bf16.mxu0 0
    %1442 = vmatmul.mubr.bf16.gmra.mrb[0].mxu0 %v1407
    %v1443 = vpop.f32.mrb[0].mxu0
    %v1444 = vadd.f32 0.0, %v1443
    %v1445 = vpop.f32.mrb[0].mxu0
    %v1446 = vadd.f32 0.0, %v1445
    %v1447 = vpop.f32.mrb[0].mxu0
    %v1448 = vpop.f32.mrb[0].mxu0
    %1449 = vdwg.mxu0
    %v1451 = vsel %vm342, %v1338, 0
    %1453 = vmatprep.subr.bf16.mxu0 %v522
    %1454 = vmatpush1.bf16.msra.mxu0 %v521
    %1455 = vmatprep.subr.bf16.mxu0 %v524
    %1456 = vmatpush1.bf16.msra.mxu0 %v523
    %1457 = vmatprep.subr.bf16.mxu0 %v526
    %1458 = vmatpush1.bf16.msra.mxu0 %v525
    %1459 = vmatprep.subr.bf16.mxu0 %v528
    %1460 = vmatpush1.bf16.msra.mxu0 %v527
    %1461 = vmatprep.subr.bf16.mxu0 0
    %1462 = vmatpush1.bf16.msra.mxu0 0
    %1463 = vmatprep.subr.bf16.mxu0 0
    %1464 = vmatpush1.bf16.msra.mxu0 0
    %1465 = vmatprep.subr.bf16.mxu0 0
    %1466 = vmatpush1.bf16.msra.mxu0 0
    %1467 = vmatprep.subr.bf16.mxu0 0
    %1468 = vmatpush1.bf16.msra.mxu0 0
    %1469 = vmatprep.subr.bf16.mxu0 0
    %1470 = vmatpush1.bf16.msra.mxu0 0
    %1471 = vmatprep.subr.bf16.mxu0 0
    %1472 = vmatpush1.bf16.msra.mxu0 0
    %1473 = vmatprep.subr.bf16.mxu0 0
    %1474 = vmatpush1.bf16.msra.mxu0 0
    %1475 = vmatprep.subr.bf16.mxu0 0
    %1476 = vmatpush1.bf16.msra.mxu0 0
    %1477 = vmatprep.subr.bf16.mxu0 0
    %1478 = vmatpush1.bf16.msra.mxu0 0
    %1479 = vmatprep.subr.bf16.mxu0 0
    %1480 = vmatpush1.bf16.msra.mxu0 0
    %1481 = vmatprep.subr.bf16.mxu0 0
    %1482 = vmatpush1.bf16.msra.mxu0 0
    %1483 = vmatprep.subr.bf16.mxu0 0
    %1484 = vmatpush1.bf16.msra.mxu0 0
    %1485 = vmatprep.mubr.bf16.mxu0 0
    %1486 = vmatmul.mubr.bf16.gmra.mrb[0].mxu0 %v1451
    %v1487 = vpop.f32.mrb[0].mxu0
    %v1488 = vadd.f32 %v1444, %v1487
    %v1489 = vpop.f32.mrb[0].mxu0
    %v1490 = vadd.f32 %v1446, %v1489
    %v1491 = vpop.f32.mrb[0].mxu0
    %v1492 = vpop.f32.mrb[0].mxu0
    %1493 = vdwg.mxu0
    %v1494 = vadd.f32 %v1488, %v582
    %v1495 = vadd.f32 %v1490, %v586
    %v1496 = vtanh.pop %v1494
    %v1497 = vtanh.pop %v1495
    %v1498 = vmul.f32 %v1496, 0.5
    %v1499 = vmul.f32 %v1497, 0.5
    %v1500 = vadd.f32 %v1498, 0.5
    %v1501 = vadd.f32 %v1499, 0.5
    %v1502 = vmul.f32 %v1500, %v1331
    %1504 = vrot.lane.b32.xlu0 %v1497, 64
    %v1505 = vpop.permute.xlu0 %1504
    %v1507 = vmul.f32 %v1500, %v1505
    %1509 = vrot.lane.b32.xlu0 %v1507, 64
    %v1510 = vpop.permute.xlu0 %1509
    %v1512 = vadd.f32 %v1502, %v1510
    %v1513 = vtanh.pop %v1512
    %1515 = vrot.lane.b32.xlu0 %v1513, 64
    %v1516 = vpop.permute.xlu0 %1515
    %v1518 = vmul.f32 %v1501, %v1516
    %v1519 = vpack.c.bf16 %v1518, %v1518
    %1520 = vmatprep.subr.bf16.mxu0 %v327
    %1521 = vmatpush1.bf16.msra.mxu0 %v326
    %1522 = vmatprep.subr.bf16.mxu0 %v329
    %1523 = vmatpush1.bf16.msra.mxu0 %v328
    %1524 = vmatprep.subr.bf16.mxu0 %v331
    %1525 = vmatpush1.bf16.msra.mxu0 %v330
    %1526 = vmatprep.subr.bf16.mxu0 %v333
    %1527 = vmatpush1.bf16.msra.mxu0 %v332
    %1528 = vmatprep.subr.bf16.mxu0 0
    %1529 = vmatpush1.bf16.msra.mxu0 0
    %1530 = vmatprep.subr.bf16.mxu0 0
    %1531 = vmatpush1.bf16.msra.mxu0 0
    %1532 = vmatprep.subr.bf16.mxu0 0
    %1533 = vmatpush1.bf16.msra.mxu0 0
    %1534 = vmatprep.subr.bf16.mxu0 0
    %1535 = vmatpush1.bf16.msra.mxu0 0
    %1536 = vmatprep.subr.bf16.mxu0 0
    %1537 = vmatpush1.bf16.msra.mxu0 0
    %1538 = vmatprep.subr.bf16.mxu0 0
    %1539 = vmatpush1.bf16.msra.mxu0 0
    %1540 = vmatprep.subr.bf16.mxu0 0
    %1541 = vmatpush1.bf16.msra.mxu0 0
    %1542 = vmatprep.subr.bf16.mxu0 0
    %1543 = vmatpush1.bf16.msra.mxu0 0
    %1544 = vmatprep.subr.bf16.mxu0 0
    %1545 = vmatpush1.bf16.msra.mxu0 0
    %1546 = vmatprep.subr.bf16.mxu0 0
    %1547 = vmatpush1.bf16.msra.mxu0 0
    %1548 = vmatprep.subr.bf16.mxu0 0
    %1549 = vmatpush1.bf16.msra.mxu0 0
    %1550 = vmatprep.subr.bf16.mxu0 0
    %1551 = vmatpush1.bf16.msra.mxu0 0
    %1552 = vmatprep.mubr.bf16.mxu0 0
    %1553 = vmatmul.mubr.bf16.gmra.mrb[0].mxu0 %v1407
    %v1554 = vpop.f32.mrb[0].mxu0
    %v1555 = vadd.f32 0.0, %v1554
    %v1556 = vpop.f32.mrb[0].mxu0
    %v1557 = vadd.f32 0.0, %v1556
    %v1558 = vpop.f32.mrb[0].mxu0
    %v1559 = vpop.f32.mrb[0].mxu0
    %1560 = vdwg.mxu0
    %v1561 = vadd.f32 %v269, %v1555
    %v1562 = vadd.f32 %v271, %v1557
    %v1563 = vtanh.pop %v1561
    %v1564 = vtanh.pop %v1562
    %v1565 = vmul.f32 %v1563, 0.5
    %v1566 = vmul.f32 %v1564, 0.5
    %v1567 = vadd.f32 %v1565, 0.5
    %v1568 = vadd.f32 %v1566, 0.5
    %v1569 = vmul.f32 %v1567, %v1398
    %1571 = vrot.lane.b32.xlu0 %v1564, 64
    %v1572 = vpop.permute.xlu0 %1571
    %v1574 = vmul.f32 %v1567, %v1572
    %1576 = vrot.lane.b32.xlu0 %v1574, 64
    %v1577 = vpop.permute.xlu0 %1576
    %v1579 = vadd.f32 %v1569, %v1577
    %v1580 = vtanh.pop %v1579
    %1582 = vrot.lane.b32.xlu0 %v1580, 64
    %v1583 = vpop.permute.xlu0 %1582
    %v1585 = vmul.f32 %v1568, %v1583
    %v1586 = vpack.c.bf16 %v1585, %v1585
    %v1588 = vsel %vm342, %v1586, 0
    %1590 = vmatprep.subr.bf16.mxu0 %v438
    %1591 = vmatpush1.bf16.msra.mxu0 %v437
    %1592 = vmatprep.subr.bf16.mxu0 %v440
    %1593 = vmatpush1.bf16.msra.mxu0 %v439
    %1594 = vmatprep.subr.bf16.mxu0 %v442
    %1595 = vmatpush1.bf16.msra.mxu0 %v441
    %1596 = vmatprep.subr.bf16.mxu0 %v444
    %1597 = vmatpush1.bf16.msra.mxu0 %v443
    %1598 = vmatprep.subr.bf16.mxu0 0
    %1599 = vmatpush1.bf16.msra.mxu0 0
    %1600 = vmatprep.subr.bf16.mxu0 0
    %1601 = vmatpush1.bf16.msra.mxu0 0
    %1602 = vmatprep.subr.bf16.mxu0 0
    %1603 = vmatpush1.bf16.msra.mxu0 0
    %1604 = vmatprep.subr.bf16.mxu0 0
    %1605 = vmatpush1.bf16.msra.mxu0 0
    %1606 = vmatprep.subr.bf16.mxu0 0
    %1607 = vmatpush1.bf16.msra.mxu0 0
    %1608 = vmatprep.subr.bf16.mxu0 0
    %1609 = vmatpush1.bf16.msra.mxu0 0
    %1610 = vmatprep.subr.bf16.mxu0 0
    %1611 = vmatpush1.bf16.msra.mxu0 0
    %1612 = vmatprep.subr.bf16.mxu0 0
    %1613 = vmatpush1.bf16.msra.mxu0 0
    %1614 = vmatprep.subr.bf16.mxu0 0
    %1615 = vmatpush1.bf16.msra.mxu0 0
    %1616 = vmatprep.subr.bf16.mxu0 0
    %1617 = vmatpush1.bf16.msra.mxu0 0
    %1618 = vmatprep.subr.bf16.mxu0 0
    %1619 = vmatpush1.bf16.msra.mxu0 0
    %1620 = vmatprep.subr.bf16.mxu0 0
    %1621 = vmatpush1.bf16.msra.mxu0 0
    %1622 = vmatprep.mubr.bf16.mxu0 0
    %1623 = vmatmul.mubr.bf16.gmra.mrb[0].mxu0 %v1588
    %v1624 = vpop.f32.mrb[0].mxu0
    %v1625 = vadd.f32 0.0, %v1624
    %v1626 = vpop.f32.mrb[0].mxu0
    %v1627 = vadd.f32 0.0, %v1626
    %v1628 = vpop.f32.mrb[0].mxu0
    %v1629 = vpop.f32.mrb[0].mxu0
    %1630 = vdwg.mxu0
    %v1632 = vsel %vm342, %v1519, 0
    %1634 = vmatprep.subr.bf16.mxu0 %v522
    %1635 = vmatpush1.bf16.msra.mxu0 %v521
    %1636 = vmatprep.subr.bf16.mxu0 %v524
    %1637 = vmatpush1.bf16.msra.mxu0 %v523
    %1638 = vmatprep.subr.bf16.mxu0 %v526
    %1639 = vmatpush1.bf16.msra.mxu0 %v525
    %1640 = vmatprep.subr.bf16.mxu0 %v528
    %1641 = vmatpush1.bf16.msra.mxu0 %v527
    %1642 = vmatprep.subr.bf16.mxu0 0
    %1643 = vmatpush1.bf16.msra.mxu0 0
    %1644 = vmatprep.subr.bf16.mxu0 0
    %1645 = vmatpush1.bf16.msra.mxu0 0
    %1646 = vmatprep.subr.bf16.mxu0 0
    %1647 = vmatpush1.bf16.msra.mxu0 0
    %1648 = vmatprep.subr.bf16.mxu0 0
    %1649 = vmatpush1.bf16.msra.mxu0 0
    %1650 = vmatprep.subr.bf16.mxu0 0
    %1651 = vmatpush1.bf16.msra.mxu0 0
    %1652 = vmatprep.subr.bf16.mxu0 0
    %1653 = vmatpush1.bf16.msra.mxu0 0
    %1654 = vmatprep.subr.bf16.mxu0 0
    %1655 = vmatpush1.bf16.msra.mxu0 0
    %1656 = vmatprep.subr.bf16.mxu0 0
    %1657 = vmatpush1.bf16.msra.mxu0 0
    %1658 = vmatprep.subr.bf16.mxu0 0
    %1659 = vmatpush1.bf16.msra.mxu0 0
    %1660 = vmatprep.subr.bf16.mxu0 0
    %1661 = vmatpush1.bf16.msra.mxu0 0
    %1662 = vmatprep.subr.bf16.mxu0 0
    %1663 = vmatpush1.bf16.msra.mxu0 0
    %1664 = vmatprep.subr.bf16.mxu0 0
    %1665 = vmatpush1.bf16.msra.mxu0 0
    %1666 = vmatprep.mubr.bf16.mxu0 0
    %1667 = vmatmul.mubr.bf16.gmra.mrb[0].mxu0 %v1632
    %v1668 = vpop.f32.mrb[0].mxu0
    %v1669 = vadd.f32 %v1625, %v1668
    %v1670 = vpop.f32.mrb[0].mxu0
    %v1671 = vadd.f32 %v1627, %v1670
    %v1672 = vpop.f32.mrb[0].mxu0
    %v1673 = vpop.f32.mrb[0].mxu0
    %1674 = vdwg.mxu0
    %v1675 = vadd.f32 %v1669, %v582
    %v1676 = vadd.f32 %v1671, %v586
    %v1677 = vtanh.pop %v1675
    %v1678 = vtanh.pop %v1676
    %v1679 = vmul.f32 %v1677, 0.5
    %v1680 = vmul.f32 %v1678, 0.5
    %v1681 = vadd.f32 %v1679, 0.5
    %v1682 = vadd.f32 %v1680, 0.5
    %v1683 = vmul.f32 %v1681, %v1512
    %1685 = vrot.lane.b32.xlu0 %v1678, 64
    %v1686 = vpop.permute.xlu0 %1685
    %v1688 = vmul.f32 %v1681, %v1686
    %1690 = vrot.lane.b32.xlu0 %v1688, 64
    %v1691 = vpop.permute.xlu0 %1690
    %v1693 = vadd.f32 %v1683, %v1691
    %v1694 = vtanh.pop %v1693
    %1696 = vrot.lane.b32.xlu0 %v1694, 64
    %v1697 = vpop.permute.xlu0 %1696
    %v1699 = vmul.f32 %v1682, %v1697
    %v1700 = vpack.c.bf16 %v1699, %v1699
    %1701 = vmatprep.subr.bf16.mxu0 %v327
    %1702 = vmatpush1.bf16.msra.mxu0 %v326
    %1703 = vmatprep.subr.bf16.mxu0 %v329
    %1704 = vmatpush1.bf16.msra.mxu0 %v328
    %1705 = vmatprep.subr.bf16.mxu0 %v331
    %1706 = vmatpush1.bf16.msra.mxu0 %v330
    %1707 = vmatprep.subr.bf16.mxu0 %v333
    %1708 = vmatpush1.bf16.msra.mxu0 %v332
    %1709 = vmatprep.subr.bf16.mxu0 0
    %1710 = vmatpush1.bf16.msra.mxu0 0
    %1711 = vmatprep.subr.bf16.mxu0 0
    %1712 = vmatpush1.bf16.msra.mxu0 0
    %1713 = vmatprep.subr.bf16.mxu0 0
    %1714 = vmatpush1.bf16.msra.mxu0 0
    %1715 = vmatprep.subr.bf16.mxu0 0
    %1716 = vmatpush1.bf16.msra.mxu0 0
    %1717 = vmatprep.subr.bf16.mxu0 0
    %1718 = vmatpush1.bf16.msra.mxu0 0
    %1719 = vmatprep.subr.bf16.mxu0 0
    %1720 = vmatpush1.bf16.msra.mxu0 0
    %1721 = vmatprep.subr.bf16.mxu0 0
    %1722 = vmatpush1.bf16.msra.mxu0 0
    %1723 = vmatprep.subr.bf16.mxu0 0
    %1724 = vmatpush1.bf16.msra.mxu0 0
    %1725 = vmatprep.subr.bf16.mxu0 0
    %1726 = vmatpush1.bf16.msra.mxu0 0
    %1727 = vmatprep.subr.bf16.mxu0 0
    %1728 = vmatpush1.bf16.msra.mxu0 0
    %1729 = vmatprep.subr.bf16.mxu0 0
    %1730 = vmatpush1.bf16.msra.mxu0 0
    %1731 = vmatprep.subr.bf16.mxu0 0
    %1732 = vmatpush1.bf16.msra.mxu0 0
    %1733 = vmatprep.mubr.bf16.mxu0 0
    %1734 = vmatmul.mubr.bf16.gmra.mrb[0].mxu0 %v1588
    %v1735 = vpop.f32.mrb[0].mxu0
    %v1736 = vadd.f32 0.0, %v1735
    %v1737 = vpop.f32.mrb[0].mxu0
    %v1738 = vadd.f32 0.0, %v1737
    %v1739 = vpop.f32.mrb[0].mxu0
    %v1740 = vpop.f32.mrb[0].mxu0
    %1741 = vdwg.mxu0
    %v1742 = vadd.f32 %v273, %v1736
    %v1743 = vadd.f32 %v275, %v1738
    %v1744 = vtanh.pop %v1742
    %v1745 = vtanh.pop %v1743
    %v1746 = vmul.f32 %v1744, 0.5
    %v1747 = vmul.f32 %v1745, 0.5
    %v1748 = vadd.f32 %v1746, 0.5
    %v1749 = vadd.f32 %v1747, 0.5
    %v1750 = vmul.f32 %v1748, %v1579
    %1752 = vrot.lane.b32.xlu0 %v1745, 64
    %v1753 = vpop.permute.xlu0 %1752
    %v1755 = vmul.f32 %v1748, %v1753
    %1757 = vrot.lane.b32.xlu0 %v1755, 64
    %v1758 = vpop.permute.xlu0 %1757
    %v1760 = vadd.f32 %v1750, %v1758
    %v1761 = vtanh.pop %v1760
    %1763 = vrot.lane.b32.xlu0 %v1761, 64
    %v1764 = vpop.permute.xlu0 %1763
    %v1766 = vmul.f32 %v1749, %v1764
    %v1767 = vpack.c.bf16 %v1766, %v1766
    %v1769 = vsel %vm342, %v1767, 0
    %1771 = vmatprep.subr.bf16.mxu0 %v438
    %1772 = vmatpush1.bf16.msra.mxu0 %v437
    %1773 = vmatprep.subr.bf16.mxu0 %v440
    %1774 = vmatpush1.bf16.msra.mxu0 %v439
    %1775 = vmatprep.subr.bf16.mxu0 %v442
    %1776 = vmatpush1.bf16.msra.mxu0 %v441
    %1777 = vmatprep.subr.bf16.mxu0 %v444
    %1778 = vmatpush1.bf16.msra.mxu0 %v443
    %1779 = vmatprep.subr.bf16.mxu0 0
    %1780 = vmatpush1.bf16.msra.mxu0 0
    %1781 = vmatprep.subr.bf16.mxu0 0
    %1782 = vmatpush1.bf16.msra.mxu0 0
    %1783 = vmatprep.subr.bf16.mxu0 0
    %1784 = vmatpush1.bf16.msra.mxu0 0
    %1785 = vmatprep.subr.bf16.mxu0 0
    %1786 = vmatpush1.bf16.msra.mxu0 0
    %1787 = vmatprep.subr.bf16.mxu0 0
    %1788 = vmatpush1.bf16.msra.mxu0 0
    %1789 = vmatprep.subr.bf16.mxu0 0
    %1790 = vmatpush1.bf16.msra.mxu0 0
    %1791 = vmatprep.subr.bf16.mxu0 0
    %1792 = vmatpush1.bf16.msra.mxu0 0
    %1793 = vmatprep.subr.bf16.mxu0 0
    %1794 = vmatpush1.bf16.msra.mxu0 0
    %1795 = vmatprep.subr.bf16.mxu0 0
    %1796 = vmatpush1.bf16.msra.mxu0 0
    %1797 = vmatprep.subr.bf16.mxu0 0
    %1798 = vmatpush1.bf16.msra.mxu0 0
    %1799 = vmatprep.subr.bf16.mxu0 0
    %1800 = vmatpush1.bf16.msra.mxu0 0
    %1801 = vmatprep.subr.bf16.mxu0 0
    %1802 = vmatpush1.bf16.msra.mxu0 0
    %1803 = vmatprep.mubr.bf16.mxu0 0
    %1804 = vmatmul.mubr.bf16.gmra.mrb[0].mxu0 %v1769
    %v1805 = vpop.f32.mrb[0].mxu0
    %v1806 = vadd.f32 0.0, %v1805
    %v1807 = vpop.f32.mrb[0].mxu0
    %v1808 = vadd.f32 0.0, %v1807
    %v1809 = vpop.f32.mrb[0].mxu0
    %v1810 = vpop.f32.mrb[0].mxu0
    %1811 = vdwg.mxu0
    %v1813 = vsel %vm342, %v1700, 0
    %1815 = vmatprep.subr.bf16.mxu0 %v522
    %1816 = vmatpush1.bf16.msra.mxu0 %v521
    %1817 = vmatprep.subr.bf16.mxu0 %v524
    %1818 = vmatpush1.bf16.msra.mxu0 %v523
    %1819 = vmatprep.subr.bf16.mxu0 %v526
    %1820 = vmatpush1.bf16.msra.mxu0 %v525
    %1821 = vmatprep.subr.bf16.mxu0 %v528
    %1822 = vmatpush1.bf16.msra.mxu0 %v527
    %1823 = vmatprep.subr.bf16.mxu0 0
    %1824 = vmatpush1.bf16.msra.mxu0 0
    %1825 = vmatprep.subr.bf16.mxu0 0
    %1826 = vmatpush1.bf16.msra.mxu0 0
    %1827 = vmatprep.subr.bf16.mxu0 0
    %1828 = vmatpush1.bf16.msra.mxu0 0
    %1829 = vmatprep.subr.bf16.mxu0 0
    %1830 = vmatpush1.bf16.msra.mxu0 0
    %1831 = vmatprep.subr.bf16.mxu0 0
    %1832 = vmatpush1.bf16.msra.mxu0 0
    %1833 = vmatprep.subr.bf16.mxu0 0
    %1834 = vmatpush1.bf16.msra.mxu0 0
    %1835 = vmatprep.subr.bf16.mxu0 0
    %1836 = vmatpush1.bf16.msra.mxu0 0
    %1837 = vmatprep.subr.bf16.mxu0 0
    %1838 = vmatpush1.bf16.msra.mxu0 0
    %1839 = vmatprep.subr.bf16.mxu0 0
    %1840 = vmatpush1.bf16.msra.mxu0 0
    %1841 = vmatprep.subr.bf16.mxu0 0
    %1842 = vmatpush1.bf16.msra.mxu0 0
    %1843 = vmatprep.subr.bf16.mxu0 0
    %1844 = vmatpush1.bf16.msra.mxu0 0
    %1845 = vmatprep.subr.bf16.mxu0 0
    %1846 = vmatpush1.bf16.msra.mxu0 0
    %1847 = vmatprep.mubr.bf16.mxu0 0
    %1848 = vmatmul.mubr.bf16.gmra.mrb[0].mxu0 %v1813
    %v1849 = vpop.f32.mrb[0].mxu0
    %v1850 = vadd.f32 %v1806, %v1849
    %v1851 = vpop.f32.mrb[0].mxu0
    %v1852 = vadd.f32 %v1808, %v1851
    %v1853 = vpop.f32.mrb[0].mxu0
    %v1854 = vpop.f32.mrb[0].mxu0
    %1855 = vdwg.mxu0
    %v1856 = vadd.f32 %v1850, %v582
    %v1857 = vadd.f32 %v1852, %v586
    %v1858 = vtanh.pop %v1856
    %v1859 = vtanh.pop %v1857
    %v1860 = vmul.f32 %v1858, 0.5
    %v1861 = vmul.f32 %v1859, 0.5
    %v1862 = vadd.f32 %v1860, 0.5
    %v1863 = vadd.f32 %v1861, 0.5
    %v1864 = vmul.f32 %v1862, %v1693
    %1866 = vrot.lane.b32.xlu0 %v1859, 64
    %v1867 = vpop.permute.xlu0 %1866
    %v1869 = vmul.f32 %v1862, %v1867
    %1871 = vrot.lane.b32.xlu0 %v1869, 64
    %v1872 = vpop.permute.xlu0 %1871
    %v1874 = vadd.f32 %v1864, %v1872
    %v1875 = vtanh.pop %v1874
    %1877 = vrot.lane.b32.xlu0 %v1875, 64
    %v1878 = vpop.permute.xlu0 %1877
    %v1880 = vmul.f32 %v1863, %v1878
    %v1881 = vpack.c.bf16 %v1880, %v1880
    %v1882 = vld [vmem:[%s7] sm:$0xf]
    %v1883 = vld [vmem:[%s7 + $0x4] sm:$0xf]
    %v1884 = vld [vmem:[%s7 + $0x8] sm:$0xf]
    %v1885 = vld [vmem:[%s7 + $0xc] sm:$0xf]
    %v1886 = vld [vmem:[%s7 + $0x10] sm:$0xf]
    %v1887 = vld [vmem:[%s7 + $0x14] sm:$0xf]
    %v1888 = vld [vmem:[%s7 + $0x18] sm:$0xf]
    %v1889 = vld [vmem:[%s7 + $0x1c] sm:$0xf]
    %v1890 = vld [vmem:[%s8] sm:$0x1]
    %v1892 = vlaneseq
    %v1893 = vshrl.u32 %v1892, 7
    %v1894 = vsub.s32 0, %v1893
    %v1895 = vrot.slane %v1890, %v1894
    %v1905 = vunpack.c.l.b16 %v1882
    %v1906 = vunpack.c.l.b16 %v1883
    %v1907 = vunpack.c.l.b16 %v1884
    %v1908 = vunpack.c.l.b16 %v1885
    %v1909 = vunpack.c.l.b16 %v1886
    %v1910 = vunpack.c.l.b16 %v1887
    %v1911 = vunpack.c.l.b16 %v1888
    %v1912 = vunpack.c.l.b16 %v1889
    %v1913 = vpack.c.b16 %v1906, %v1905
    %v1914 = vpack.c.b16 %v1908, %v1907
    %v1915 = vpack.c.b16 %v1910, %v1909
    %v1916 = vpack.c.b16 %v1912, %v1911
    %v1922 = vsel %vm342, %v1881, 0
    %1924 = vmatprep.subr.bf16.mxu0 0
    %1925 = vmatpush1.bf16.msra.mxu0 %v1913
    %1926 = vmatprep.subr.bf16.mxu0 0
    %1927 = vmatpush1.bf16.msra.mxu0 %v1914
    %1928 = vmatprep.subr.bf16.mxu0 0
    %1929 = vmatpush1.bf16.msra.mxu0 %v1915
    %1930 = vmatprep.subr.bf16.mxu0 0
    %1931 = vmatpush1.bf16.msra.mxu0 %v1916
    %1932 = vmatprep.subr.bf16.mxu0 0
    %1933 = vmatpush1.bf16.msra.mxu0 0
    %1934 = vmatprep.subr.bf16.mxu0 0
    %1935 = vmatpush1.bf16.msra.mxu0 0
    %1936 = vmatprep.subr.bf16.mxu0 0
    %1937 = vmatpush1.bf16.msra.mxu0 0
    %1938 = vmatprep.subr.bf16.mxu0 0
    %1939 = vmatpush1.bf16.msra.mxu0 0
    %1940 = vmatprep.subr.bf16.mxu0 0
    %1941 = vmatpush1.bf16.msra.mxu0 0
    %1942 = vmatprep.subr.bf16.mxu0 0
    %1943 = vmatpush1.bf16.msra.mxu0 0
    %1944 = vmatprep.subr.bf16.mxu0 0
    %1945 = vmatpush1.bf16.msra.mxu0 0
    %1946 = vmatprep.subr.bf16.mxu0 0
    %1947 = vmatpush1.bf16.msra.mxu0 0
    %1948 = vmatprep.subr.bf16.mxu0 0
    %1949 = vmatpush1.bf16.msra.mxu0 0
    %1950 = vmatprep.subr.bf16.mxu0 0
    %1951 = vmatpush1.bf16.msra.mxu0 0
    %1952 = vmatprep.subr.bf16.mxu0 0
    %1953 = vmatpush1.bf16.msra.mxu0 0
    %1954 = vmatprep.subr.bf16.mxu0 0
    %1955 = vmatpush1.bf16.msra.mxu0 0
    %1956 = vmatprep.mubr.bf16.mxu0 0
    %1957 = vmatmul.mubr.bf16.gmra.mrb[0].mxu0 %v1922
    %v1958 = vpop.f32.mrb[0].mxu0
    %v1959 = vadd.f32 %v1895, %v1958
    %v1960 = vpop.f32.mrb[0].mxu0
    %v1961 = vpop.f32.mrb[0].mxu0
    %v1962 = vpop.f32.mrb[0].mxu0
    %1963 = vdwg.mxu0
    %v1964 = vmax.f32 %v1959, 0.0
    %v1965 = vpack.c.bf16 %v1964, %v1964
    %v1966 = vld [vmem:[%s9] sm:$0xf]
    %v1967 = vld [vmem:[%s9 + $0x4] sm:$0xf]
    %v1968 = vld [vmem:[%s9 + $0x8] sm:$0xf]
    %v1969 = vld [vmem:[%s9 + $0xc] sm:$0xf]
    %v1970 = vld [vmem:[%s9 + $0x10] sm:$0xf]
    %v1971 = vld [vmem:[%s9 + $0x14] sm:$0xf]
    %v1972 = vld [vmem:[%s9 + $0x18] sm:$0xf]
    %v1973 = vld [vmem:[%s9 + $0x1c] sm:$0xf]
    %v1974 = vld [vmem:[%s10] sm:$0x1]
    %v1976 = vlaneseq
    %v1977 = vshrl.u32 %v1976, 7
    %v1978 = vsub.s32 0, %v1977
    %v1979 = vrot.slane %v1974, %v1978
    %v1989 = vunpack.c.l.b16 %v1966
    %v1990 = vunpack.c.l.b16 %v1967
    %v1991 = vunpack.c.l.b16 %v1968
    %v1992 = vunpack.c.l.b16 %v1969
    %v1993 = vunpack.c.l.b16 %v1970
    %v1994 = vunpack.c.l.b16 %v1971
    %v1995 = vunpack.c.l.b16 %v1972
    %v1996 = vunpack.c.l.b16 %v1973
    %v1997 = vpack.c.b16 %v1990, %v1989
    %v1998 = vpack.c.b16 %v1992, %v1991
    %v1999 = vpack.c.b16 %v1994, %v1993
    %v2000 = vpack.c.b16 %v1996, %v1995
    %v2006 = vsel %vm342, %v1965, 0
    %2008 = vmatprep.subr.bf16.mxu0 0
    %2009 = vmatpush1.bf16.msra.mxu0 %v1997
    %2010 = vmatprep.subr.bf16.mxu0 0
    %2011 = vmatpush1.bf16.msra.mxu0 %v1998
    %2012 = vmatprep.subr.bf16.mxu0 0
    %2013 = vmatpush1.bf16.msra.mxu0 %v1999
    %2014 = vmatprep.subr.bf16.mxu0 0
    %2015 = vmatpush1.bf16.msra.mxu0 %v2000
    %2016 = vmatprep.subr.bf16.mxu0 0
    %2017 = vmatpush1.bf16.msra.mxu0 0
    %2018 = vmatprep.subr.bf16.mxu0 0
    %2019 = vmatpush1.bf16.msra.mxu0 0
    %2020 = vmatprep.subr.bf16.mxu0 0
    %2021 = vmatpush1.bf16.msra.mxu0 0
    %2022 = vmatprep.subr.bf16.mxu0 0
    %2023 = vmatpush1.bf16.msra.mxu0 0
    %2024 = vmatprep.subr.bf16.mxu0 0
    %2025 = vmatpush1.bf16.msra.mxu0 0
    %2026 = vmatprep.subr.bf16.mxu0 0
    %2027 = vmatpush1.bf16.msra.mxu0 0
    %2028 = vmatprep.subr.bf16.mxu0 0
    %2029 = vmatpush1.bf16.msra.mxu0 0
    %2030 = vmatprep.subr.bf16.mxu0 0
    %2031 = vmatpush1.bf16.msra.mxu0 0
    %2032 = vmatprep.subr.bf16.mxu0 0
    %2033 = vmatpush1.bf16.msra.mxu0 0
    %2034 = vmatprep.subr.bf16.mxu0 0
    %2035 = vmatpush1.bf16.msra.mxu0 0
    %2036 = vmatprep.subr.bf16.mxu0 0
    %2037 = vmatpush1.bf16.msra.mxu0 0
    %2038 = vmatprep.subr.bf16.mxu0 0
    %2039 = vmatpush1.bf16.msra.mxu0 0
    %2040 = vmatprep.mubr.bf16.mxu0 0
    %2041 = vmatmul.mubr.bf16.gmra.mrb[0].mxu0 %v2006
    %v2042 = vpop.f32.mrb[0].mxu0
    %v2043 = vadd.f32 %v1979, %v2042
    %v2044 = vpop.f32.mrb[0].mxu0
    %v2045 = vpop.f32.mrb[0].mxu0
    %v2046 = vpop.f32.mrb[0].mxu0
    %2047 = vdwg.mxu0
    %v2048 = vmax.f32 %v2043, 0.0
    %v2049 = vpack.c.bf16 %v2048, %v2048
    %v2050 = vld [vmem:[#allocation11] sm:$0xf]
    %v2051 = vld [vmem:[#allocation11 + $0x4] sm:$0xf]
    %v2052 = vld [vmem:[#allocation11 + $0x8] sm:$0xf]
    %v2053 = vld [vmem:[#allocation11 + $0xc] sm:$0xf]
    %v2054 = vld [vmem:[#allocation11 + $0x10] sm:$0xf]
    %v2055 = vld [vmem:[#allocation11 + $0x14] sm:$0xf]
    %v2056 = vld [vmem:[#allocation11 + $0x18] sm:$0xf]
    %v2057 = vld [vmem:[#allocation11 + $0x1c] sm:$0xf]
    %v2058 = vld [vmem:[%s12] sm:$0x1]
    %v2060 = vlaneseq
    %v2061 = vshrl.u32 %v2060, 7
    %v2062 = vsub.s32 0, %v2061
    %v2063 = vrot.slane %v2058, %v2062
    %v2073 = vunpack.c.l.b16 %v2050
    %v2074 = vunpack.c.l.b16 %v2051
    %v2075 = vunpack.c.l.b16 %v2052
    %v2076 = vunpack.c.l.b16 %v2053
    %v2077 = vunpack.c.l.b16 %v2054
    %v2078 = vunpack.c.l.b16 %v2055
    %v2079 = vunpack.c.l.b16 %v2056
    %v2080 = vunpack.c.l.b16 %v2057
    %v2081 = vpack.c.b16 %v2074, %v2073
    %v2082 = vpack.c.b16 %v2076, %v2075
    %v2083 = vpack.c.b16 %v2078, %v2077
    %v2084 = vpack.c.b16 %v2080, %v2079
    %v2090 = vsel %vm342, %v2049, 0
    %2092 = vmatprep.subr.bf16.mxu0 0
    %2093 = vmatpush1.bf16.msra.mxu0 %v2081
    %2094 = vmatprep.subr.bf16.mxu0 0
    %2095 = vmatpush1.bf16.msra.mxu0 %v2082
    %2096 = vmatprep.subr.bf16.mxu0 0
    %2097 = vmatpush1.bf16.msra.mxu0 %v2083
    %2098 = vmatprep.subr.bf16.mxu0 0
    %2099 = vmatpush1.bf16.msra.mxu0 %v2084
    %2100 = vmatprep.subr.bf16.mxu0 0
    %2101 = vmatpush1.bf16.msra.mxu0 0
    %2102 = vmatprep.subr.bf16.mxu0 0
    %2103 = vmatpush1.bf16.msra.mxu0 0
    %2104 = vmatprep.subr.bf16.mxu0 0
    %2105 = vmatpush1.bf16.msra.mxu0 0
    %2106 = vmatprep.subr.bf16.mxu0 0
    %2107 = vmatpush1.bf16.msra.mxu0 0
    %2108 = vmatprep.subr.bf16.mxu0 0
    %2109 = vmatpush1.bf16.msra.mxu0 0
    %2110 = vmatprep.subr.bf16.mxu0 0
    %2111 = vmatpush1.bf16.msra.mxu0 0
    %2112 = vmatprep.subr.bf16.mxu0 0
    %2113 = vmatpush1.bf16.msra.mxu0 0
    %2114 = vmatprep.subr.bf16.mxu0 0
    %2115 = vmatpush1.bf16.msra.mxu0 0
    %2116 = vmatprep.subr.bf16.mxu0 0
    %2117 = vmatpush1.bf16.msra.mxu0 0
    %2118 = vmatprep.subr.bf16.mxu0 0
    %2119 = vmatpush1.bf16.msra.mxu0 0
    %2120 = vmatprep.subr.bf16.mxu0 0
    %2121 = vmatpush1.bf16.msra.mxu0 0
    %2122 = vmatprep.subr.bf16.mxu0 0
    %2123 = vmatpush1.bf16.msra.mxu0 0
    %2124 = vmatprep.mubr.bf16.mxu0 0
    %2125 = vmatmul.mubr.bf16.gmra.mrb[0].mxu0 %v2090
    %v2126 = vpop.f32.mrb[0].mxu0
    %v2127 = vadd.f32 %v2063, %v2126
    %v2128 = vpop.f32.mrb[0].mxu0
    %v2129 = vpop.f32.mrb[0].mxu0
    %v2130 = vpop.f32.mrb[0].mxu0
    %2131 = vdwg.mxu0
    %2132 = vst [vmem:[#allocation13] sm:$0xff] %v2127
    // Predicated region
    $region78: #{tpu_custom_call.1} parent=1 // pred_check
      _
    $region79: #{tpu_custom_call.1} parent=1 // pred_check_branch
      %2134 = sbr.rel (0) target = $region81
    $region80: #{tpu_custom_call.1} parent=1 // pred_region
      %s2136 = ssub.s32 128, 128
      %2137 = vsyncadd [#allocation4], %s2136
      %s2139 = sshll.u32 [#allocation13], 4
      %s2140 = int_to_ptr.vmem [resolvable:$true] %s2139
      %2142 = dma.vmem_to_hbm [thread:$0]  %s2140, 128, %s13, [#allocation4]
    $region81: #{tpu_custom_call.1} parent=1 // pred_fallthru
      _
    // Predicated region
    $region82: #{tpu_custom_call.1} parent=1 // pred_check
      _
    $region83: #{tpu_custom_call.1} parent=1 // pred_check_branch
      %2144 = sbr.rel (0) target = $region85
    $region84: #{tpu_custom_call.1} parent=1 // pred_region
      %2145 = dma.done [#allocation4], 128
    $region85: #{tpu_custom_call.1} parent=1 // pred_fallthru
      _
    %2146 = vsyncpa [#allocation3], 1
    %2147 = vsyncpa [#allocation6], 1
    %2148 = vsyncpa [#allocation9], 1
    %2149 = vsyncpa [#allocation12], 1
    %2150 = vsyncpa [#allocation4], 1

</llo_original>
